<compile_context>
chip_gen: v6e
topology: v6e:2x2x1
jax: 0.10.0
libtpu: 0.0.40
codegen_flags: <defaults>
</compile_context>

<pallas_src>
import functools

import jax
import jax.numpy as jnp
from jax.experimental import pallas as pl
from jax.experimental.pallas import tpu as pltpu

TAU = 0.05
BN_EPS = 1e-5
LANE = 128
NEG_PAD = -1e30            # bias of padded logit lanes -> exp() underflows to 0
_TARGET_TILE_ROWS = 1024   # rows per grid tile (whole sequences)


# ---------------------------------------------------------------------------
# Fused kernel: (BN-folded) MLP + softmax + action head + transition counts.
# ---------------------------------------------------------------------------
def bcsdn_fused_kernel(x_ref, wb_ref, bb_ref,
                       w2_ref, b2_ref, w3_ref, b3_ref,
                       w4_ref, b4_ref, w5_ref, b5_ref,
                       slab_ref, counts_ref, *, seq_len, n_skill):
    cd = wb_ref.dtype                                 # compute dtype (bf16 default)
    tm = x_ref.shape[0]
    k = n_skill

    def dense(h, w_ref, b_ref):
        return jnp.dot(h, w_ref[...],
                       preferred_element_type=jnp.float32) + b_ref[...]

    # Layer 1 (BatchNorm folded into its weights) + linear action head share a
    # single MXU matmul on the raw observations:
    #   cols [0,256)   -> MLP layer-1 pre-activations
    #   cols [256,384) -> gterm - x @ gain^T, pre-positioned at block lanes
    #                     [2K, 2K+K*A), zeros elsewhere.
    z = dense(x_ref[...], wb_ref, bb_ref)             # (TM, 384) f32
    h = jnp.tanh(z[:, :256]).astype(cd)                # (TM, 256) bf16 live
    action_blk = z[:, 256:]                            # (TM, 128) f32, aligned slice

    h = jnp.tanh(dense(h, w2_ref, b2_ref)).astype(cd)  # (TM, 256)
    h = jnp.tanh(dense(h, w3_ref, b3_ref)).astype(cd)  # (TM, 128) 16 real lanes
    h = jnp.tanh(dense(h, w4_ref, b4_ref)).astype(cd)  # (TM, 128) 16 real lanes

    # w5 holds TWO identical copies of its real columns (lanes [0,K) and
    # [K,2K)) and a -1e30 bias on all other lanes, so the softmax below yields
    # the probs copy directly at lanes [K,2K) -- no cross-lane data movement.
    logits = dense(h, w5_ref, b5_ref)                  # (TM, 128) f32

    # Categorical(logits).probs == softmax; padded lanes underflow to exactly 0.
    m = jnp.max(logits, axis=-1, keepdims=True)
    e = jnp.exp(logits - m)
    denom = 0.5 * jnp.sum(e, axis=-1, keepdims=True)   # halve: logits duplicated
    probs = e * pl.reciprocal(denom, approx=True)      # EUP rcp (free slot)

    # Pack every row-wise output into ONE lane-dense slab:
    #   [0,K) logits | [K,2K) probs | [2K,2K+K*A) action | rest 0
    lane = jax.lax.broadcasted_iota(jnp.int32, (tm, LANE), 1)
    lp = jnp.where(lane < k, logits, probs)
    slab_ref[...] = jnp.where(lane < 2 * k, lp, action_blk)

    # Per-tile transition counts over in-sequence (t, t+1) pairs.  Tiles hold
    # whole sequences, so no valid pair crosses a tile boundary; pairs that
    # cross a sequence boundary inside the tile are masked out.
    pk = probs[:, :k]                                  # (TM, K)
    ridx = jax.lax.broadcasted_iota(jnp.int32, (tm - 1, 1), 0)
    in_seq = ((ridx % seq_len) != (seq_len - 1)).astype(jnp.float32)
    ph = pk[:-1, :] * in_seq
    pt = pk[1:, :]
    counts = jax.lax.dot_general(ph, pt, (((0,), (0,)), ((), ())),
                                 preferred_element_type=jnp.float32)
    counts_ref[...] = counts.reshape(1, k, k)


# ---------------------------------------------------------------------------
# Helpers
# ---------------------------------------------------------------------------
def _pad2(a, rows, cols, fill=0.0):
    return jnp.pad(a, ((0, rows - a.shape[0]), (0, cols - a.shape[1])),
                   constant_values=fill)


def _pick_seqs_per_tile(batch, seq_len, target_rows):
    """Seqs per tile: divisor of batch, (bb*seq_len)%8==0 (or whole array),
    fits the row target; prefer an even number of tiles (v7x: 2 TensorCores)."""
    divs = [d for d in range(1, batch + 1) if batch % d == 0]
    legal = [d for d in divs if (d * seq_len) % 8 == 0 or d == batch]
    fitting = [d for d in legal if d * seq_len <= target_rows] or [min(legal)]
    even = [d for d in fitting if (batch // d) % 2 == 0]
    return max(even) if even else max(fitting)


# ---------------------------------------------------------------------------
# Wrapper: full BCSDN.forward
# ---------------------------------------------------------------------------
def bcsdn_forward(img, params, *, act_dim, state_dim, n_skill,
                  compute_dtype=jnp.bfloat16,
                  target_tile_rows=_TARGET_TILE_ROWS):
    B, S, obs_dim = img.shape
    assert obs_dim == state_dim == 28, "BCSDN backbone is hard-wired to 28 features"
    K = n_skill
    ka = n_skill * act_dim
    assert 2 * K + ka <= LANE, "slab layout needs 2*n_skill + n_skill*act_dim <= 128"
    N = B * S
    x_flat = img.reshape(N, obs_dim).astype(jnp.float32)

    # BatchNorm1d(28) training-mode batch statistics (tiny JAX reduction),
    # folded into the first linear layer below.
    mean = jnp.mean(x_flat, axis=0, keepdims=True)
    var = jnp.mean(jnp.square(x_flat - mean), axis=0, keepdims=True)
    scale = params["bn_gamma"] * jax.lax.rsqrt(var + BN_EPS)          # (1, 28)
    shift = params["bn_beta"] - mean * scale                          # (1, 28)
    # TODO(synk): eval-mode BatchNorm (running_mean/var) is not modeled; this is
    # training-mode batch statistics, matching nn.BatchNorm1d defaults.

    cd = compute_dtype

    # Layer 1 with BN folded in, concatenated with the action head so that one
    # matmul on raw x produces both.  W_big: (28, 384), b_big: (1, 384).
    w1f = scale.reshape(obs_dim, 1) * params["w1"]                    # (28, 256)
    b1f = shift @ params["w1"] + params["b1"]                         # (1, 256)
    gain3 = params["gain"].reshape(n_skill, act_dim, state_dim)
    gain_t = gain3.reshape(ka, state_dim).T                           # (28, K*A)
    gterm = jnp.einsum("kad,kd->ka", gain3, params["goal_mu"]).reshape(1, ka)
    act_w = jnp.zeros((obs_dim, LANE), jnp.float32)
    act_w = act_w.at[:, 2 * K:2 * K + ka].set(-gain_t)
    act_b = jnp.zeros((1, LANE), jnp.float32)
    act_b = act_b.at[:, 2 * K:2 * K + ka].set(gterm)
    w_big = jnp.concatenate([w1f, act_w], axis=1).astype(cd)          # (28, 384)
    b_big = jnp.concatenate([b1f, act_b], axis=1).astype(jnp.float32)  # f32 bias

    w2 = params["w2"].astype(cd)
    b2 = params["b2"].astype(jnp.float32)
    w3 = _pad2(params["w3"], 256, LANE).astype(cd)
    b3 = _pad2(params["b3"], 1, LANE)
    w4 = _pad2(params["w4"], LANE, LANE).astype(cd)
    b4 = _pad2(params["b4"], 1, LANE)
    # w5/b5 duplicated at lanes [0,K) and [K,2K); other lanes biased to -1e30
    # (kept in f32) so exp() underflows to exactly 0 in the softmax.
    w5 = jnp.zeros((LANE, LANE), jnp.float32)
    w5 = w5.at[:params["w5"].shape[0], :K].set(params["w5"])
    w5 = w5.at[:params["w5"].shape[0], K:2 * K].set(params["w5"])
    w5 = w5.astype(cd)
    b5 = jnp.full((1, LANE), NEG_PAD, jnp.float32)
    b5 = b5.at[:, :K].set(params["b5"])
    b5 = b5.at[:, K:2 * K].set(params["b5"])

    # Grid over row tiles made of whole sequences.
    bb = _pick_seqs_per_tile(B, S, target_tile_rows)
    tm = bb * S
    num_tiles = B // bb

    row = lambda i: (i, 0)
    rep = lambda i: (0, 0)

    kernel = functools.partial(bcsdn_fused_kernel, seq_len=S, n_skill=n_skill)
    slab, counts_p = pl.pallas_call(
        kernel,
        grid=(num_tiles,),
        in_specs=[
            pl.BlockSpec((tm, obs_dim), row),                     # x (compute dtype)
            pl.BlockSpec((obs_dim, 256 + LANE), rep),             # W_big
            pl.BlockSpec((1, 256 + LANE), rep),                   # b_big
            pl.BlockSpec((256, 256), rep), pl.BlockSpec((1, 256), rep),
            pl.BlockSpec((256, LANE), rep), pl.BlockSpec((1, LANE), rep),
            pl.BlockSpec((LANE, LANE), rep), pl.BlockSpec((1, LANE), rep),
            pl.BlockSpec((LANE, LANE), rep), pl.BlockSpec((1, LANE), rep),
        ],
        out_specs=(
            pl.BlockSpec((tm, LANE), row),                        # packed slab
            pl.BlockSpec((1, n_skill, n_skill), lambda i: (i, 0, 0)),
        ),
        out_shape=(
            jax.ShapeDtypeStruct((N, LANE), jnp.float32),
            jax.ShapeDtypeStruct((num_tiles, n_skill, n_skill), jnp.float32),
        ),
        compiler_params=pltpu.CompilerParams(
            dimension_semantics=("parallel",)),
    )(x_flat.astype(cd), w_big, b_big, w2, b2, w3, b3, w4, b4, w5, b5)

    # Tiny epilogue in plain JAX: unpack the slab and finish the counts.
    logits = slab[:, :K].reshape(B, S, K)
    probs = slab[:, K:2 * K].reshape(B, S, K)
    action_mean = slab[:, 2 * K:2 * K + ka].reshape(B, S, n_skill, act_dim)
    action_sigma = jnp.full_like(action_mean, TAU)

    # PyTorch: (p[:, :-1]^T @ p[:, 1:] + 1).sum(dim=0) -> +1 per batch element
    # before the batch sum, hence +B after summing the per-tile partials.
    counts = jnp.sum(counts_p, axis=0) + jnp.float32(B)
    transition_mat = counts / jnp.sum(counts, axis=1, keepdims=True)

    return {
        "latent_action_mean": action_mean,
        "latent_action_sigma": action_sigma,
        "goal_switching_prior_logits": logits,
        "goal_switching_prior_probs": probs,
        # NOTE: the PyTorch module returns the *soft* Categorical probs here.
        "goal_onehot_idx": probs,
        "goal_idx_seq": jnp.argmax(probs, axis=-1),
        "transition_mat": transition_mat,
    }


# ---------------------------------------------------------------------------
# Deterministic parameter construction (matches __init__ shapes)
# ---------------------------------------------------------------------------
def make_params(key, *, act_dim, state_dim, n_skill):
    ks = jax.random.split(key, 12)

    def lin(kw, kb, fin, fout):
        w = jax.random.normal(kw, (fin, fout), jnp.float32) * 0.1   # stored (in, out)
        b = jax.random.normal(kb, (1, fout), jnp.float32) * 0.1
        return w, b

    p = {}
    p["w1"], p["b1"] = lin(ks[0], ks[1], 28, 256)
    p["w2"], p["b2"] = lin(ks[2], ks[3], 256, 256)
    p["w3"], p["b3"] = lin(ks[4], ks[5], 256, 16)
    p["w4"], p["b4"] = lin(ks[6], ks[7], 16, 16)
    p["w5"], p["b5"] = lin(ks[8], ks[9], 16, n_skill)
    p["goal_mu"] = jax.random.normal(ks[10], (n_skill, state_dim), jnp.float32)
    p["gain"] = jax.random.normal(ks[11], (n_skill, act_dim * state_dim), jnp.float32)
    # nn.BatchNorm1d(28) affine parameters (gamma=1, beta=0 at init).
    p["bn_gamma"] = jnp.ones((1, 28), jnp.float32)
    p["bn_beta"] = jnp.zeros((1, 28), jnp.float32)
    return p


if __name__ == "__main__":
    B, S = 2, 8
    OBS_DIM = STATE_DIM = 28          # fixed by nn.Linear(28, 256) + broadcasting
    ACT_DIM = 4
    N_SKILL = 16

    key = jax.random.PRNGKey(0)
    k_params, k_x = jax.random.split(key)
    params = make_params(k_params, act_dim=ACT_DIM, state_dim=STATE_DIM,
                         n_skill=N_SKILL)
    img = jax.random.normal(k_x, (B, S, OBS_DIM), jnp.float32)

    fwd = jax.jit(functools.partial(bcsdn_forward, act_dim=ACT_DIM,
                                    state_dim=STATE_DIM, n_skill=N_SKILL))
    out = fwd(img, params)
    jax.block_until_ready(out)

    # light sanity checks (loose tolerances: bf16 MXU + approx EUP reciprocal)
    assert out["latent_action_mean"].shape == (B, S, N_SKILL, ACT_DIM)
    assert out["goal_onehot_idx"].shape == (B, S, N_SKILL)
    assert out["goal_idx_seq"].shape == (B, S)
    assert out["transition_mat"].shape == (N_SKILL, N_SKILL)
    assert bool(jnp.allclose(out["goal_onehot_idx"].sum(-1), 1.0, atol=1e-2))
    assert bool(jnp.allclose(out["transition_mat"].sum(-1), 1.0, atol=1e-5))
    ref_probs = jax.nn.softmax(out["goal_switching_prior_logits"], axis=-1)
    assert bool(jnp.allclose(ref_probs, out["goal_onehot_idx"], atol=1e-2))

    print("KERNEL_OK")
</pallas_src>

<mosaic_0001>
module attributes {stable_mosaic.version = 11 : i64} {
  func.func @bcsdn_fused_kernel(%arg0: i32, %arg1: memref<8x28xbf16, #tpu.memory_space<vmem>>, %arg2: memref<28x384xbf16, #tpu.memory_space<vmem>>, %arg3: memref<1x384xf32, #tpu.memory_space<vmem>>, %arg4: memref<256x256xbf16, #tpu.memory_space<vmem>>, %arg5: memref<1x256xf32, #tpu.memory_space<vmem>>, %arg6: memref<256x128xbf16, #tpu.memory_space<vmem>>, %arg7: memref<1x128xf32, #tpu.memory_space<vmem>>, %arg8: memref<128x128xbf16, #tpu.memory_space<vmem>>, %arg9: memref<1x128xf32, #tpu.memory_space<vmem>>, %arg10: memref<128x128xbf16, #tpu.memory_space<vmem>>, %arg11: memref<1x128xf32, #tpu.memory_space<vmem>>, %arg12: memref<8x128xf32, #tpu.memory_space<vmem>>, %arg13: memref<1x16x16xf32, #tpu.memory_space<vmem>>) attributes {dimension_semantics = [#tpu.dimension_semantics<parallel>], iteration_bounds = array<i64: 2>, scalar_prefetch = 0 : i64, scratch_operands = 0 : i64, tpu.core_type = #tpu.core_type<tc>, window_params = [{transform_indices = @transform_0, window_bounds = array<i64: 8, 28>}, {pipeline_mode = #tpu.pipeline_mode<synchronous>, transform_indices = @transform_1, window_bounds = array<i64: 28, 384>}, {pipeline_mode = #tpu.pipeline_mode<synchronous>, transform_indices = @transform_2, window_bounds = array<i64: 1, 384>}, {pipeline_mode = #tpu.pipeline_mode<synchronous>, transform_indices = @transform_3, window_bounds = array<i64: 256, 256>}, {pipeline_mode = #tpu.pipeline_mode<synchronous>, transform_indices = @transform_4, window_bounds = array<i64: 1, 256>}, {pipeline_mode = #tpu.pipeline_mode<synchronous>, transform_indices = @transform_5, window_bounds = array<i64: 256, 128>}, {pipeline_mode = #tpu.pipeline_mode<synchronous>, transform_indices = @transform_6, window_bounds = array<i64: 1, 128>}, {pipeline_mode = #tpu.pipeline_mode<synchronous>, transform_indices = @transform_7, window_bounds = array<i64: 128, 128>}, {pipeline_mode = #tpu.pipeline_mode<synchronous>, transform_indices = @transform_8, window_bounds = array<i64: 1, 128>}, {pipeline_mode = #tpu.pipeline_mode<synchronous>, transform_indices = @transform_9, window_bounds = array<i64: 128, 128>}, {pipeline_mode = #tpu.pipeline_mode<synchronous>, transform_indices = @transform_10, window_bounds = array<i64: 1, 128>}, {transform_indices = @transform_11, window_bounds = array<i64: 8, 128>}, {transform_indices = @transform_12, window_bounds = array<i64: 1, 16, 16>}]} {
    %c0 = arith.constant 0 : index
    %c0_0 = arith.constant 0 : index
    %0 = vector.load %arg1[%c0, %c0_0] : memref<8x28xbf16, #tpu.memory_space<vmem>>, vector<8x28xbf16>
    %c0_1 = arith.constant 0 : index
    %c0_2 = arith.constant 0 : index
    %1 = vector.load %arg2[%c0_1, %c0_2] : memref<28x384xbf16, #tpu.memory_space<vmem>>, vector<28x384xbf16>
    %cst = arith.constant dense<0.000000e+00> : vector<8x384xf32>
    %2 = tpu.matmul %0, %1, %cst {dimension_numbers = #tpu.dot_dimension_numbers<[1], [0], [0], [1], [0, 0, 1, 1], [], []>} : vector<8x28xbf16>, vector<28x384xbf16>, vector<8x384xf32> -> vector<8x384xf32>
    %c0_3 = arith.constant 0 : index
    %c0_4 = arith.constant 0 : index
    %3 = vector.load %arg3[%c0_3, %c0_4] : memref<1x384xf32, #tpu.memory_space<vmem>>, vector<1x384xf32>
    %4 = vector.broadcast %3 : vector<1x384xf32> to vector<8x384xf32>
    %5 = arith.addf %2, %4 : vector<8x384xf32>
    %6 = vector.extract_strided_slice %5 {offsets = [0, 0], sizes = [8, 256], strides = [1, 1]} : vector<8x384xf32> to vector<8x256xf32>
    %7 = math.tanh %6 : vector<8x256xf32>
    %8 = arith.truncf %7 : vector<8x256xf32> to vector<8x256xbf16>
    %9 = vector.extract_strided_slice %5 {offsets = [0, 256], sizes = [8, 128], strides = [1, 1]} : vector<8x384xf32> to vector<8x128xf32>
    %c0_5 = arith.constant 0 : index
    %c0_6 = arith.constant 0 : index
    %10 = vector.load %arg4[%c0_5, %c0_6] : memref<256x256xbf16, #tpu.memory_space<vmem>>, vector<256x256xbf16>
    %cst_7 = arith.constant dense<0.000000e+00> : vector<8x256xf32>
    %11 = tpu.matmul %8, %10, %cst_7 {dimension_numbers = #tpu.dot_dimension_numbers<[1], [0], [0], [1], [0, 0, 1, 1], [], []>} : vector<8x256xbf16>, vector<256x256xbf16>, vector<8x256xf32> -> vector<8x256xf32>
    %c0_8 = arith.constant 0 : index
    %c0_9 = arith.constant 0 : index
    %12 = vector.load %arg5[%c0_8, %c0_9] : memref<1x256xf32, #tpu.memory_space<vmem>>, vector<1x256xf32>
    %13 = vector.broadcast %12 : vector<1x256xf32> to vector<8x256xf32>
    %14 = arith.addf %11, %13 : vector<8x256xf32>
    %15 = math.tanh %14 : vector<8x256xf32>
    %16 = arith.truncf %15 : vector<8x256xf32> to vector<8x256xbf16>
    %c0_10 = arith.constant 0 : index
    %c0_11 = arith.constant 0 : index
    %17 = vector.load %arg6[%c0_10, %c0_11] : memref<256x128xbf16, #tpu.memory_space<vmem>>, vector<256x128xbf16>
    %cst_12 = arith.constant dense<0.000000e+00> : vector<8x128xf32>
    %18 = tpu.matmul %16, %17, %cst_12 {dimension_numbers = #tpu.dot_dimension_numbers<[1], [0], [0], [1], [0, 0, 1, 1], [], []>} : vector<8x256xbf16>, vector<256x128xbf16>, vector<8x128xf32> -> vector<8x128xf32>
    %c0_13 = arith.constant 0 : index
    %c0_14 = arith.constant 0 : index
    %19 = vector.load %arg7[%c0_13, %c0_14] : memref<1x128xf32, #tpu.memory_space<vmem>>, vector<1x128xf32>
    %20 = vector.broadcast %19 : vector<1x128xf32> to vector<8x128xf32>
    %21 = arith.addf %18, %20 : vector<8x128xf32>
    %22 = math.tanh %21 : vector<8x128xf32>
    %23 = arith.truncf %22 : vector<8x128xf32> to vector<8x128xbf16>
    %c0_15 = arith.constant 0 : index
    %c0_16 = arith.constant 0 : index
    %24 = vector.load %arg8[%c0_15, %c0_16] : memref<128x128xbf16, #tpu.memory_space<vmem>>, vector<128x128xbf16>
    %cst_17 = arith.constant dense<0.000000e+00> : vector<8x128xf32>
    %25 = tpu.matmul %23, %24, %cst_17 {dimension_numbers = #tpu.dot_dimension_numbers<[1], [0], [0], [1], [0, 0, 1, 1], [], []>} : vector<8x128xbf16>, vector<128x128xbf16>, vector<8x128xf32> -> vector<8x128xf32>
    %c0_18 = arith.constant 0 : index
    %c0_19 = arith.constant 0 : index
    %26 = vector.load %arg9[%c0_18, %c0_19] : memref<1x128xf32, #tpu.memory_space<vmem>>, vector<1x128xf32>
    %27 = vector.broadcast %26 : vector<1x128xf32> to vector<8x128xf32>
    %28 = arith.addf %25, %27 : vector<8x128xf32>
    %29 = math.tanh %28 : vector<8x128xf32>
    %30 = arith.truncf %29 : vector<8x128xf32> to vector<8x128xbf16>
    %c0_20 = arith.constant 0 : index
    %c0_21 = arith.constant 0 : index
    %31 = vector.load %arg10[%c0_20, %c0_21] : memref<128x128xbf16, #tpu.memory_space<vmem>>, vector<128x128xbf16>
    %cst_22 = arith.constant dense<0.000000e+00> : vector<8x128xf32>
    %32 = tpu.matmul %30, %31, %cst_22 {dimension_numbers = #tpu.dot_dimension_numbers<[1], [0], [0], [1], [0, 0, 1, 1], [], []>} : vector<8x128xbf16>, vector<128x128xbf16>, vector<8x128xf32> -> vector<8x128xf32>
    %c0_23 = arith.constant 0 : index
    %c0_24 = arith.constant 0 : index
    %33 = vector.load %arg11[%c0_23, %c0_24] : memref<1x128xf32, #tpu.memory_space<vmem>>, vector<1x128xf32>
    %34 = vector.broadcast %33 : vector<1x128xf32> to vector<8x128xf32>
    %35 = arith.addf %32, %34 : vector<8x128xf32>
    %cst_25 = arith.constant dense<0xFF800000> : vector<8xf32>
    %36 = vector.multi_reduction <maximumf>, %35, %cst_25 [1] : vector<8x128xf32> to vector<8xf32>
    %37 = vector.shape_cast %36 : vector<8xf32> to vector<8x1xf32>
    %38 = vector.broadcast %37 : vector<8x1xf32> to vector<8x128xf32>
    %39 = arith.subf %35, %38 : vector<8x128xf32>
    %40 = math.exp %39 : vector<8x128xf32>
    %cst_26 = arith.constant dense<0.000000e+00> : vector<8xf32>
    %41 = vector.multi_reduction <add>, %40, %cst_26 [1] : vector<8x128xf32> to vector<8xf32>
    %42 = vector.shape_cast %41 : vector<8xf32> to vector<8x1xf32>
    %cst_27 = arith.constant 5.000000e-01 : f32
    %43 = vector.broadcast %cst_27 : f32 to vector<8x1xf32>
    %44 = arith.mulf %43, %42 : vector<8x1xf32>
    %45 = tpu.reciprocal %44 {approx = true} : vector<8x1xf32> -> vector<8x1xf32>
    %46 = vector.broadcast %45 : vector<8x1xf32> to vector<8x128xf32>
    %47 = arith.mulf %40, %46 : vector<8x128xf32>
    %48 = tpu.iota {dimensions = array<i32: 1>} : vector<8x128xi32>
    %c16_i32 = arith.constant 16 : i32
    %49 = vector.broadcast %c16_i32 : i32 to vector<8x128xi32>
    %50 = arith.cmpi slt, %48, %49 : vector<8x128xi32>
    %51 = arith.select %50, %35, %47 : vector<8x128xi1>, vector<8x128xf32>
    %c32_i32 = arith.constant 32 : i32
    %52 = vector.broadcast %c32_i32 : i32 to vector<8x128xi32>
    %53 = arith.cmpi slt, %48, %52 : vector<8x128xi32>
    %54 = arith.select %53, %51, %9 : vector<8x128xi1>, vector<8x128xf32>
    %c0_28 = arith.constant 0 : index
    %c0_29 = arith.constant 0 : index
    %55 = vector.load %arg12[%c0_28, %c0_29] : memref<8x128xf32, #tpu.memory_space<vmem>>, vector<8x128xf32>
    tpu.vector_store %arg12[%c0_28, %c0_29], %54 {strides = array<i32>} : memref<8x128xf32, #tpu.memory_space<vmem>>, vector<8x128xf32>,
    %56 = vector.extract_strided_slice %47 {offsets = [0, 0], sizes = [8, 16], strides = [1, 1]} : vector<8x128xf32> to vector<8x16xf32>
    %57 = tpu.iota {dimensions = array<i32: 0>} : vector<7x1xi32>
    %c8_i32 = arith.constant 8 : i32
    %c0_i32 = arith.constant 0 : i32
    %58 = arith.cmpi eq, %c8_i32, %c0_i32 : i32
    %c1_i32 = arith.constant 1 : i32
    %59 = arith.select %58, %c1_i32, %c8_i32 : i32
    %60 = vector.broadcast %59 : i32 to vector<7x1xi32>
    %61 = arith.remsi %57, %60 : vector<7x1xi32>
    %c0_i32_30 = arith.constant 0 : i32
    %62 = vector.broadcast %c0_i32_30 : i32 to vector<7x1xi32>
    %63 = arith.cmpi ne, %61, %62 : vector<7x1xi32>
    %c0_i32_31 = arith.constant 0 : i32
    %64 = vector.broadcast %c0_i32_31 : i32 to vector<7x1xi32>
    %65 = arith.cmpi slt, %61, %64 : vector<7x1xi32>
    %c0_i32_32 = arith.constant 0 : i32
    %66 = arith.cmpi slt, %59, %c0_i32_32 : i32
    %67 = vector.broadcast %66 : i1 to vector<7x1xi1>
    %68 = vector.broadcast %67 : vector<7x1xi1> to vector<7x1xi1>
    %69 = arith.xori %65, %68 : vector<7x1xi1>
    %70 = arith.andi %69, %63 : vector<7x1xi1>
    %71 = vector.broadcast %59 : i32 to vector<7x1xi32>
    %72 = arith.addi %61, %71 : vector<7x1xi32>
    %73 = arith.select %70, %72, %61 : vector<7x1xi1>, vector<7x1xi32>
    %c7_i32 = arith.constant 7 : i32
    %74 = vector.broadcast %c7_i32 : i32 to vector<7x1xi32>
    %75 = arith.cmpi ne, %73, %74 : vector<7x1xi32>
    %76 = arith.extui %75 : vector<7x1xi1> to vector<7x1xi32>
    %77 = arith.sitofp %76 : vector<7x1xi32> to vector<7x1xf32>
    %78 = vector.extract_strided_slice %56 {offsets = [0, 0], sizes = [7, 16], strides = [1, 1]} : vector<8x16xf32> to vector<7x16xf32>
    %79 = vector.broadcast %77 : vector<7x1xf32> to vector<7x16xf32>
    %80 = arith.mulf %78, %79 : vector<7x16xf32>
    %81 = vector.extract_strided_slice %56 {offsets = [1, 0], sizes = [7, 16], strides = [1, 1]} : vector<8x16xf32> to vector<7x16xf32>
    %cst_33 = arith.constant dense<0.000000e+00> : vector<16x16xf32>
    %82 = tpu.matmul %80, %81, %cst_33 {dimension_numbers = #tpu.dot_dimension_numbers<[0], [0], [1], [1], [0, 1, 1, 1], [], []>} : vector<7x16xf32>, vector<7x16xf32>, vector<16x16xf32> -> vector<16x16xf32>
    %83 = vector.shape_cast %82 : vector<16x16xf32> to vector<1x16x16xf32>
    %c0_34 = arith.constant 0 : index
    %c0_35 = arith.constant 0 : index
    %c0_36 = arith.constant 0 : index
    %84 = vector.load %arg13[%c0_34, %c0_35, %c0_36] : memref<1x16x16xf32, #tpu.memory_space<vmem>>, vector<1x16x16xf32>
    tpu.vector_store %arg13[%c0_34, %c0_35, %c0_36], %83 {strides = array<i32>} : memref<1x16x16xf32, #tpu.memory_space<vmem>>, vector<1x16x16xf32>,
    return
  }
  func.func @transform_0(%arg0: i32) -> (i32, i32) {
    %c0_i32 = arith.constant 0 : i32
    %c0_i32_0 = arith.constant 0 : i32
    return %arg0, %c0_i32 : i32, i32
  }
  func.func @transform_1(%arg0: i32) -> (i32, i32) {
    %c0_i32 = arith.constant 0 : i32
    %c0_i32_0 = arith.constant 0 : i32
    %c0_i32_1 = arith.constant 0 : i32
    return %c0_i32, %c0_i32_0 : i32, i32
  }
  func.func @transform_2(%arg0: i32) -> (i32, i32) {
    %c0_i32 = arith.constant 0 : i32
    %c0_i32_0 = arith.constant 0 : i32
    %c0_i32_1 = arith.constant 0 : i32
    return %c0_i32, %c0_i32_0 : i32, i32
  }
  func.func @transform_3(%arg0: i32) -> (i32, i32) {
    %c0_i32 = arith.constant 0 : i32
    %c0_i32_0 = arith.constant 0 : i32
    %c0_i32_1 = arith.constant 0 : i32
    return %c0_i32, %c0_i32_0 : i32, i32
  }
  func.func @transform_4(%arg0: i32) -> (i32, i32) {
    %c0_i32 = arith.constant 0 : i32
    %c0_i32_0 = arith.constant 0 : i32
    %c0_i32_1 = arith.constant 0 : i32
    return %c0_i32, %c0_i32_0 : i32, i32
  }
  func.func @transform_5(%arg0: i32) -> (i32, i32) {
    %c0_i32 = arith.constant 0 : i32
    %c0_i32_0 = arith.constant 0 : i32
    %c0_i32_1 = arith.constant 0 : i32
    return %c0_i32, %c0_i32_0 : i32, i32
  }
  func.func @transform_6(%arg0: i32) -> (i32, i32) {
    %c0_i32 = arith.constant 0 : i32
    %c0_i32_0 = arith.constant 0 : i32
    %c0_i32_1 = arith.constant 0 : i32
    return %c0_i32, %c0_i32_0 : i32, i32
  }
  func.func @transform_7(%arg0: i32) -> (i32, i32) {
    %c0_i32 = arith.constant 0 : i32
    %c0_i32_0 = arith.constant 0 : i32
    %c0_i32_1 = arith.constant 0 : i32
    return %c0_i32, %c0_i32_0 : i32, i32
  }
  func.func @transform_8(%arg0: i32) -> (i32, i32) {
    %c0_i32 = arith.constant 0 : i32
    %c0_i32_0 = arith.constant 0 : i32
    %c0_i32_1 = arith.constant 0 : i32
    return %c0_i32, %c0_i32_0 : i32, i32
  }
  func.func @transform_9(%arg0: i32) -> (i32, i32) {
    %c0_i32 = arith.constant 0 : i32
    %c0_i32_0 = arith.constant 0 : i32
    %c0_i32_1 = arith.constant 0 : i32
    return %c0_i32, %c0_i32_0 : i32, i32
  }
  func.func @transform_10(%arg0: i32) -> (i32, i32) {
    %c0_i32 = arith.constant 0 : i32
    %c0_i32_0 = arith.constant 0 : i32
    %c0_i32_1 = arith.constant 0 : i32
    return %c0_i32, %c0_i32_0 : i32, i32
  }
  func.func @transform_11(%arg0: i32) -> (i32, i32) {
    %c0_i32 = arith.constant 0 : i32
    %c0_i32_0 = arith.constant 0 : i32
    return %arg0, %c0_i32 : i32, i32
  }
  func.func @transform_12(%arg0: i32) -> (i32, i32, i32) {
    %c0_i32 = arith.constant 0 : i32
    %c0_i32_0 = arith.constant 0 : i32
    %c0_i32_1 = arith.constant 0 : i32
    return %arg0, %c0_i32, %c0_i32_0 : i32, i32, i32
  }
}

</mosaic_0001>

<llo_original>
// kernel: bcsdn_forward.1
$region0: #{bcsdn_forward.1}
  #allocation0 [shape = 'u32[]', space=smem, size = 0x4, offset = 0x4, fixed_abs, tag = 'smem constant byte address 0x4 - core index']
  #allocation1 [shape = 'u32[144,128]{1,0:T(1,128)}', space=vmem, size = 0x12000, scoped, tag = 'internal scratch']
  %s0 = inlined_call_operand.vmem [shape: bf16[16,28], index: 0, kind: input, shape index: {}]
  %s1 = inlined_call_operand.vmem [shape: bf16[28,384], index: 1, kind: input, shape index: {}]
  %s2 = inlined_call_operand.vmem [shape: f32[1,384], index: 2, kind: input, shape index: {}]
  %s3 = inlined_call_operand.vmem [shape: bf16[256,256], index: 3, kind: input, shape index: {}]
  %s4 = inlined_call_operand.vmem [shape: f32[1,256], index: 4, kind: input, shape index: {}]
  %s5 = inlined_call_operand.vmem [shape: bf16[256,128], index: 5, kind: input, shape index: {}]
  %s6 = inlined_call_operand.vmem [shape: f32[1,128], index: 6, kind: input, shape index: {}]
  %s7 = inlined_call_operand.vmem [shape: bf16[128,128], index: 7, kind: input, shape index: {}]
  %s8 = inlined_call_operand.vmem [shape: f32[1,128], index: 8, kind: input, shape index: {}]
  %s9 = inlined_call_operand.vmem [shape: bf16[128,128], index: 9, kind: input, shape index: {}]
  %s10 = inlined_call_operand.vmem [shape: f32[1,128], index: 10, kind: input, shape index: {}]
  %s11 = inlined_call_operand.vmem [shape: f32[16,128], index: 11, kind: output, shape index: {0}]
  %s12 = inlined_call_operand.vmem [shape: f32[2,16,16], index: 12, kind: output, shape index: {1}]
  %13 = xla_tuple %s11, %s12
  %s14 = sld [smem:[#allocation0]]
  $region85: #{bcsdn_forward.1} parent=0
    _
  %s16 = ssub.s32 1, %s14
  %s17 = scalar_select 0, %s16, %s14
  loop: start=0, step=1, limit=4
  $region2: #{bcsdn_forward.1} parent=0 // loop_pre_header
    _
  $region3: #{bcsdn_forward.1} parent=0 // loop_header
    %s19 = sphi 0, %s23
    %p20 = scmp.ge.s32.totalorder %s19, 4
    %s29 = sphi 0, %s31
    %s32 = sphi 0, %s29
    %s33 = sphi 0, %s32
    %s49 = sphi 0, %s33
    %s53 = sphi 0, %s53
    %s55 = sphi 0, %s53
    %s56 = sphi 0, %s55
    %s70 = sphi 0, %s56
    %s74 = sphi 0, %s74
    %s76 = sphi 0, %s74
    %s77 = sphi 0, %s76
    %s91 = sphi 0, %s77
    %s95 = sphi 0, %s95
    %s97 = sphi 0, %s95
    %s98 = sphi 0, %s97
    %s112 = sphi 0, %s98
    %s116 = sphi 0, %s116
    %s118 = sphi 0, %s116
    %s119 = sphi 0, %s118
    %s133 = sphi 0, %s119
    %s137 = sphi 0, %s137
    %s139 = sphi 0, %s137
    %s140 = sphi 0, %s139
    %s154 = sphi 0, %s140
    %s158 = sphi 0, %s158
    %s160 = sphi 0, %s158
    %s161 = sphi 0, %s160
    %s175 = sphi 0, %s161
    %s179 = sphi 0, %s179
    %s181 = sphi 0, %s179
    %s182 = sphi 0, %s181
    %s196 = sphi 0, %s182
    %s200 = sphi 0, %s200
    %s202 = sphi 0, %s200
    %s203 = sphi 0, %s202
    %s217 = sphi 0, %s203
    %s221 = sphi 0, %s221
    %s223 = sphi 0, %s221
    %s224 = sphi 0, %s223
    %s238 = sphi 0, %s224
    %s242 = sphi 0, %s242
    %s244 = sphi 0, %s242
    %s245 = sphi 0, %s244
    %s259 = sphi 0, %s245
    %s265 = sphi 0, %s267
    %s268 = sphi 0, %s265
    %s269 = sphi 0, %s268
    %s285 = sphi 0, %s269
    %s291 = sphi 0, %s293
    %s294 = sphi 0, %s291
    %s295 = sphi 0, %s294
    %s311 = sphi 0, %s295
  $region4: #{bcsdn_forward.1} parent=0 // loop_header_branch
    %22 = sbr.rel (%p20) target = $region8
  $region5: #{bcsdn_forward.1} parent=0 // loop_body
    %s24 = ssub.s32 %s19, 1
    %s25 = ssub.s32 %s19, 2
    %s26 = sadd.s32 %s19, 1
    %s27 = ssub.s32 %s19, %s26
    %p28 = scmp.eq.s32.totalorder %s27, 0
    %s30 = sadd.s32 %s29, 1
    %s31 = scalar_select %p28, %s29, %s30
    %p34 = pneg %p28
    %p35 = scmp.eq.s32.totalorder %s19, 1
    %p36 = por %p34, %p35
    %p37 = scmp.ne.s32.totalorder %s29, %s32
    %p38 = scmp.eq.s32.totalorder %s19, 0
    %p39 = por %p37, %p38
    %p40 = scmp.ne.s32.totalorder %s29, %s32
    %p41 = scmp.eq.s32.totalorder %s24, 1
    %p42 = por %p40, %p41
    %p43 = scmp.ne.s32.totalorder %s32, %s33
    %p44 = scmp.eq.s32.totalorder %s24, 0
    %p45 = por %p43, %p44
    %p46 = scmp.ne.s32.totalorder %s32, %s33
    %p47 = scmp.eq.s32.totalorder %s25, 1
    %p48 = por %p46, %p47
    %p50 = scmp.ne.s32.totalorder %s33, %s49
    %p51 = scmp.eq.s32.totalorder %s25, 0
    %p52 = por %p50, %p51
    %s54 = sadd.s32 %s53, 1
    %p57 = scmp.eq.s32.totalorder %s19, 1
    %p58 = scmp.ne.s32.totalorder %s53, %s55
    %p59 = scmp.eq.s32.totalorder %s19, 0
    %p60 = por %p58, %p59
    %p61 = scmp.ne.s32.totalorder %s53, %s55
    %p62 = scmp.eq.s32.totalorder %s24, 1
    %p63 = por %p61, %p62
    %p64 = scmp.ne.s32.totalorder %s55, %s56
    %p65 = scmp.eq.s32.totalorder %s24, 0
    %p66 = por %p64, %p65
    %p67 = scmp.ne.s32.totalorder %s55, %s56
    %p68 = scmp.eq.s32.totalorder %s25, 1
    %p69 = por %p67, %p68
    %p71 = scmp.ne.s32.totalorder %s56, %s70
    %p72 = scmp.eq.s32.totalorder %s25, 0
    %p73 = por %p71, %p72
    %s75 = sadd.s32 %s74, 1
    %p78 = scmp.eq.s32.totalorder %s19, 1
    %p79 = scmp.ne.s32.totalorder %s74, %s76
    %p80 = scmp.eq.s32.totalorder %s19, 0
    %p81 = por %p79, %p80
    %p82 = scmp.ne.s32.totalorder %s74, %s76
    %p83 = scmp.eq.s32.totalorder %s24, 1
    %p84 = por %p82, %p83
    %p85 = scmp.ne.s32.totalorder %s76, %s77
    %p86 = scmp.eq.s32.totalorder %s24, 0
    %p87 = por %p85, %p86
    %p88 = scmp.ne.s32.totalorder %s76, %s77
    %p89 = scmp.eq.s32.totalorder %s25, 1
    %p90 = por %p88, %p89
    %p92 = scmp.ne.s32.totalorder %s77, %s91
    %p93 = scmp.eq.s32.totalorder %s25, 0
    %p94 = por %p92, %p93
    %s96 = sadd.s32 %s95, 1
    %p99 = scmp.eq.s32.totalorder %s19, 1
    %p100 = scmp.ne.s32.totalorder %s95, %s97
    %p101 = scmp.eq.s32.totalorder %s19, 0
    %p102 = por %p100, %p101
    %p103 = scmp.ne.s32.totalorder %s95, %s97
    %p104 = scmp.eq.s32.totalorder %s24, 1
    %p105 = por %p103, %p104
    %p106 = scmp.ne.s32.totalorder %s97, %s98
    %p107 = scmp.eq.s32.totalorder %s24, 0
    %p108 = por %p106, %p107
    %p109 = scmp.ne.s32.totalorder %s97, %s98
    %p110 = scmp.eq.s32.totalorder %s25, 1
    %p111 = por %p109, %p110
    %p113 = scmp.ne.s32.totalorder %s98, %s112
    %p114 = scmp.eq.s32.totalorder %s25, 0
    %p115 = por %p113, %p114
    %s117 = sadd.s32 %s116, 1
    %p120 = scmp.eq.s32.totalorder %s19, 1
    %p121 = scmp.ne.s32.totalorder %s116, %s118
    %p122 = scmp.eq.s32.totalorder %s19, 0
    %p123 = por %p121, %p122
    %p124 = scmp.ne.s32.totalorder %s116, %s118
    %p125 = scmp.eq.s32.totalorder %s24, 1
    %p126 = por %p124, %p125
    %p127 = scmp.ne.s32.totalorder %s118, %s119
    %p128 = scmp.eq.s32.totalorder %s24, 0
    %p129 = por %p127, %p128
    %p130 = scmp.ne.s32.totalorder %s118, %s119
    %p131 = scmp.eq.s32.totalorder %s25, 1
    %p132 = por %p130, %p131
    %p134 = scmp.ne.s32.totalorder %s119, %s133
    %p135 = scmp.eq.s32.totalorder %s25, 0
    %p136 = por %p134, %p135
    %s138 = sadd.s32 %s137, 1
    %p141 = scmp.eq.s32.totalorder %s19, 1
    %p142 = scmp.ne.s32.totalorder %s137, %s139
    %p143 = scmp.eq.s32.totalorder %s19, 0
    %p144 = por %p142, %p143
    %p145 = scmp.ne.s32.totalorder %s137, %s139
    %p146 = scmp.eq.s32.totalorder %s24, 1
    %p147 = por %p145, %p146
    %p148 = scmp.ne.s32.totalorder %s139, %s140
    %p149 = scmp.eq.s32.totalorder %s24, 0
    %p150 = por %p148, %p149
    %p151 = scmp.ne.s32.totalorder %s139, %s140
    %p152 = scmp.eq.s32.totalorder %s25, 1
    %p153 = por %p151, %p152
    %p155 = scmp.ne.s32.totalorder %s140, %s154
    %p156 = scmp.eq.s32.totalorder %s25, 0
    %p157 = por %p155, %p156
    %s159 = sadd.s32 %s158, 1
    %p162 = scmp.eq.s32.totalorder %s19, 1
    %p163 = scmp.ne.s32.totalorder %s158, %s160
    %p164 = scmp.eq.s32.totalorder %s19, 0
    %p165 = por %p163, %p164
    %p166 = scmp.ne.s32.totalorder %s158, %s160
    %p167 = scmp.eq.s32.totalorder %s24, 1
    %p168 = por %p166, %p167
    %p169 = scmp.ne.s32.totalorder %s160, %s161
    %p170 = scmp.eq.s32.totalorder %s24, 0
    %p171 = por %p169, %p170
    %p172 = scmp.ne.s32.totalorder %s160, %s161
    %p173 = scmp.eq.s32.totalorder %s25, 1
    %p174 = por %p172, %p173
    %p176 = scmp.ne.s32.totalorder %s161, %s175
    %p177 = scmp.eq.s32.totalorder %s25, 0
    %p178 = por %p176, %p177
    %s180 = sadd.s32 %s179, 1
    %p183 = scmp.eq.s32.totalorder %s19, 1
    %p184 = scmp.ne.s32.totalorder %s179, %s181
    %p185 = scmp.eq.s32.totalorder %s19, 0
    %p186 = por %p184, %p185
    %p187 = scmp.ne.s32.totalorder %s179, %s181
    %p188 = scmp.eq.s32.totalorder %s24, 1
    %p189 = por %p187, %p188
    %p190 = scmp.ne.s32.totalorder %s181, %s182
    %p191 = scmp.eq.s32.totalorder %s24, 0
    %p192 = por %p190, %p191
    %p193 = scmp.ne.s32.totalorder %s181, %s182
    %p194 = scmp.eq.s32.totalorder %s25, 1
    %p195 = por %p193, %p194
    %p197 = scmp.ne.s32.totalorder %s182, %s196
    %p198 = scmp.eq.s32.totalorder %s25, 0
    %p199 = por %p197, %p198
    %s201 = sadd.s32 %s200, 1
    %p204 = scmp.eq.s32.totalorder %s19, 1
    %p205 = scmp.ne.s32.totalorder %s200, %s202
    %p206 = scmp.eq.s32.totalorder %s19, 0
    %p207 = por %p205, %p206
    %p208 = scmp.ne.s32.totalorder %s200, %s202
    %p209 = scmp.eq.s32.totalorder %s24, 1
    %p210 = por %p208, %p209
    %p211 = scmp.ne.s32.totalorder %s202, %s203
    %p212 = scmp.eq.s32.totalorder %s24, 0
    %p213 = por %p211, %p212
    %p214 = scmp.ne.s32.totalorder %s202, %s203
    %p215 = scmp.eq.s32.totalorder %s25, 1
    %p216 = por %p214, %p215
    %p218 = scmp.ne.s32.totalorder %s203, %s217
    %p219 = scmp.eq.s32.totalorder %s25, 0
    %p220 = por %p218, %p219
    %s222 = sadd.s32 %s221, 1
    %p225 = scmp.eq.s32.totalorder %s19, 1
    %p226 = scmp.ne.s32.totalorder %s221, %s223
    %p227 = scmp.eq.s32.totalorder %s19, 0
    %p228 = por %p226, %p227
    %p229 = scmp.ne.s32.totalorder %s221, %s223
    %p230 = scmp.eq.s32.totalorder %s24, 1
    %p231 = por %p229, %p230
    %p232 = scmp.ne.s32.totalorder %s223, %s224
    %p233 = scmp.eq.s32.totalorder %s24, 0
    %p234 = por %p232, %p233
    %p235 = scmp.ne.s32.totalorder %s223, %s224
    %p236 = scmp.eq.s32.totalorder %s25, 1
    %p237 = por %p235, %p236
    %p239 = scmp.ne.s32.totalorder %s224, %s238
    %p240 = scmp.eq.s32.totalorder %s25, 0
    %p241 = por %p239, %p240
    %s243 = sadd.s32 %s242, 1
    %p246 = scmp.eq.s32.totalorder %s19, 1
    %p247 = scmp.ne.s32.totalorder %s242, %s244
    %p248 = scmp.eq.s32.totalorder %s19, 0
    %p249 = por %p247, %p248
    %p250 = scmp.ne.s32.totalorder %s242, %s244
    %p251 = scmp.eq.s32.totalorder %s24, 1
    %p252 = por %p250, %p251
    %p253 = scmp.ne.s32.totalorder %s244, %s245
    %p254 = scmp.eq.s32.totalorder %s24, 0
    %p255 = por %p253, %p254
    %p256 = scmp.ne.s32.totalorder %s244, %s245
    %p257 = scmp.eq.s32.totalorder %s25, 1
    %p258 = por %p256, %p257
    %p260 = scmp.ne.s32.totalorder %s245, %s259
    %p261 = scmp.eq.s32.totalorder %s25, 0
    %p262 = por %p260, %p261
    %s263 = ssub.s32 %s19, %s26
    %p264 = scmp.eq.s32.totalorder %s263, 0
    %s266 = sadd.s32 %s265, 1
    %s267 = scalar_select %p264, %s265, %s266
    %p270 = pneg %p264
    %p271 = scmp.eq.s32.totalorder %s19, 1
    %p272 = por %p270, %p271
    %p273 = scmp.ne.s32.totalorder %s265, %s268
    %p274 = scmp.eq.s32.totalorder %s19, 0
    %p275 = por %p273, %p274
    %p276 = scmp.ne.s32.totalorder %s265, %s268
    %p277 = scmp.eq.s32.totalorder %s24, 1
    %p278 = por %p276, %p277
    %p279 = scmp.ne.s32.totalorder %s268, %s269
    %p280 = scmp.eq.s32.totalorder %s24, 0
    %p281 = por %p279, %p280
    %p282 = scmp.ne.s32.totalorder %s268, %s269
    %p283 = scmp.eq.s32.totalorder %s25, 1
    %p284 = por %p282, %p283
    %p286 = scmp.ne.s32.totalorder %s269, %s285
    %p287 = scmp.eq.s32.totalorder %s25, 0
    %p288 = por %p286, %p287
    %s289 = ssub.s32 %s19, %s26
    %p290 = scmp.eq.s32.totalorder %s289, 0
    %s292 = sadd.s32 %s291, 1
    %s293 = scalar_select %p290, %s291, %s292
    %p296 = pneg %p290
    %p297 = scmp.eq.s32.totalorder %s19, 1
    %p298 = por %p296, %p297
    %p299 = scmp.ne.s32.totalorder %s291, %s294
    %p300 = scmp.eq.s32.totalorder %s19, 0
    %p301 = por %p299, %p300
    %p302 = scmp.ne.s32.totalorder %s291, %s294
    %p303 = scmp.eq.s32.totalorder %s24, 1
    %p304 = por %p302, %p303
    %p305 = scmp.ne.s32.totalorder %s294, %s295
    %p306 = scmp.eq.s32.totalorder %s24, 0
    %p307 = por %p305, %p306
    %p308 = scmp.ne.s32.totalorder %s294, %s295
    %p309 = scmp.eq.s32.totalorder %s25, 1
    %p310 = por %p308, %p309
    %p312 = scmp.ne.s32.totalorder %s295, %s311
    %p313 = scmp.eq.s32.totalorder %s25, 0
    %p314 = por %p312, %p313
    %p315 = scmp.le.s32.totalorder 1, %s19
    %p316 = scmp.lt.s32.totalorder %s19, 3
    %p317 = pnand %p315, %p316
    %p318 = pneg %p317
    // Predicated region
    $region9: #{bcsdn_forward.1} parent=5 // pred_check
      _
    $region10: #{bcsdn_forward.1} parent=5 // pred_check_branch
      %320 = sbr.rel (%p317) target = $region12
    $region11: #{bcsdn_forward.1} parent=5 // pred_region
      %s321 = ssub.s32 %s19, 1
      // Predicated region
      $region13: #{bcsdn_forward.1} parent=11 // pred_check
        %p322 = pneg %p66
      $region14: #{bcsdn_forward.1} parent=11 // pred_check_branch
        %324 = sbr.rel (%p322) target = $region16
      $region15: #{bcsdn_forward.1} parent=11 // pred_region
        _
      $region16: #{bcsdn_forward.1} parent=11 // pred_fallthru
        _
      // Predicated region
      $region17: #{bcsdn_forward.1} parent=11 // pred_check
        %p325 = pneg %p87
      $region18: #{bcsdn_forward.1} parent=11 // pred_check_branch
        %327 = sbr.rel (%p325) target = $region20
      $region19: #{bcsdn_forward.1} parent=11 // pred_region
        _
      $region20: #{bcsdn_forward.1} parent=11 // pred_fallthru
        _
      // Predicated region
      $region21: #{bcsdn_forward.1} parent=11 // pred_check
        %p328 = pneg %p108
      $region22: #{bcsdn_forward.1} parent=11 // pred_check_branch
        %330 = sbr.rel (%p328) target = $region24
      $region23: #{bcsdn_forward.1} parent=11 // pred_region
        _
      $region24: #{bcsdn_forward.1} parent=11 // pred_fallthru
        _
      // Predicated region
      $region25: #{bcsdn_forward.1} parent=11 // pred_check
        %p331 = pneg %p129
      $region26: #{bcsdn_forward.1} parent=11 // pred_check_branch
        %333 = sbr.rel (%p331) target = $region28
      $region27: #{bcsdn_forward.1} parent=11 // pred_region
        _
      $region28: #{bcsdn_forward.1} parent=11 // pred_fallthru
        _
      // Predicated region
      $region29: #{bcsdn_forward.1} parent=11 // pred_check
        %p334 = pneg %p150
      $region30: #{bcsdn_forward.1} parent=11 // pred_check_branch
        %336 = sbr.rel (%p334) target = $region32
      $region31: #{bcsdn_forward.1} parent=11 // pred_region
        _
      $region32: #{bcsdn_forward.1} parent=11 // pred_fallthru
        _
      // Predicated region
      $region33: #{bcsdn_forward.1} parent=11 // pred_check
        %p337 = pneg %p171
      $region34: #{bcsdn_forward.1} parent=11 // pred_check_branch
        %339 = sbr.rel (%p337) target = $region36
      $region35: #{bcsdn_forward.1} parent=11 // pred_region
        _
      $region36: #{bcsdn_forward.1} parent=11 // pred_fallthru
        _
      // Predicated region
      $region37: #{bcsdn_forward.1} parent=11 // pred_check
        %p340 = pneg %p192
      $region38: #{bcsdn_forward.1} parent=11 // pred_check_branch
        %342 = sbr.rel (%p340) target = $region40
      $region39: #{bcsdn_forward.1} parent=11 // pred_region
        _
      $region40: #{bcsdn_forward.1} parent=11 // pred_fallthru
        _
      // Predicated region
      $region41: #{bcsdn_forward.1} parent=11 // pred_check
        %p343 = pneg %p213
      $region42: #{bcsdn_forward.1} parent=11 // pred_check_branch
        %345 = sbr.rel (%p343) target = $region44
      $region43: #{bcsdn_forward.1} parent=11 // pred_region
        _
      $region44: #{bcsdn_forward.1} parent=11 // pred_fallthru
        _
      // Predicated region
      $region45: #{bcsdn_forward.1} parent=11 // pred_check
        %p346 = pneg %p234
      $region46: #{bcsdn_forward.1} parent=11 // pred_check_branch
        %348 = sbr.rel (%p346) target = $region48
      $region47: #{bcsdn_forward.1} parent=11 // pred_region
        _
      $region48: #{bcsdn_forward.1} parent=11 // pred_fallthru
        _
      // Predicated region
      $region49: #{bcsdn_forward.1} parent=11 // pred_check
        %p349 = pneg %p255
      $region50: #{bcsdn_forward.1} parent=11 // pred_check_branch
        %351 = sbr.rel (%p349) target = $region52
      $region51: #{bcsdn_forward.1} parent=11 // pred_region
        _
      $region52: #{bcsdn_forward.1} parent=11 // pred_fallthru
        _
    $region12: #{bcsdn_forward.1} parent=5 // pred_fallthru
      _
    %p352 = scmp.lt.s32.totalorder %s19, 2
    // Predicated region
    $region53: #{bcsdn_forward.1} parent=5 // pred_check
      %p353 = pneg %p352
    $region54: #{bcsdn_forward.1} parent=5 // pred_check_branch
      %355 = sbr.rel (%p353) target = $region56
    $region55: #{bcsdn_forward.1} parent=5 // pred_region
      // Predicated region
      $region57: #{bcsdn_forward.1} parent=55 // pred_check
        %p356 = pneg %p39
      $region58: #{bcsdn_forward.1} parent=55 // pred_check_branch
        %358 = sbr.rel (%p356) target = $region60
      $region59: #{bcsdn_forward.1} parent=55 // pred_region
        %p359 = scmp.lt.s32.totalorder %s19, 1
        %s360 = scalar_select %p359, %s19, 1
        %s361 = smul.addr %s360, 4
        %s362 = scalar_lea.vmem %s0, %s361
      $region60: #{bcsdn_forward.1} parent=55 // pred_fallthru
        _
    $region56: #{bcsdn_forward.1} parent=5 // pred_fallthru
      _
    %p363 = scmp.le.s32.totalorder 1, %s19
    %p364 = scmp.lt.s32.totalorder %s19, 3
    %p365 = pnand %p363, %p364
    %p366 = pneg %p365
    // Predicated region
    $region61: #{bcsdn_forward.1} parent=5 // pred_check
      _
    $region62: #{bcsdn_forward.1} parent=5 // pred_check_branch
      %368 = sbr.rel (%p365) target = $region64
    $region63: #{bcsdn_forward.1} parent=5 // pred_region
      %s369 = ssub.s32 %s19, 1
      %p370 = scmp.lt.s32.totalorder %s24, 1
      %s371 = scalar_select %p370, %s24, 1
      %s372 = smul.addr %s371, 4
      %s373 = scalar_lea.vmem %s0, %s372
      %p374 = pneg %p45
      %p375 = pneg %p42
      %p376 = pneg %p66
      %p377 = pneg %p63
      %p378 = pneg %p87
      %p379 = pneg %p84
      %p380 = pneg %p108
      %p381 = pneg %p105
      %p382 = pneg %p129
      %p383 = pneg %p126
      %p384 = pneg %p150
      %p385 = pneg %p147
      %p386 = pneg %p171
      %p387 = pneg %p168
      %p388 = pneg %p192
      %p389 = pneg %p189
      %p390 = pneg %p213
      %p391 = pneg %p210
      %p392 = pneg %p234
      %p393 = pneg %p231
      %p394 = pneg %p255
      %p395 = pneg %p252
      %p396 = pneg %p281
      %p397 = pneg %p278
      %p398 = scmp.lt.s32.totalorder %s24, 1
      %s399 = scalar_select %p398, %s24, 1
      %s400 = smul.addr %s399, 8
      %s401 = scalar_lea.vmem %s11, %s400
      %p402 = pneg %p307
      %p403 = pneg %p304
      %p404 = scmp.lt.s32.totalorder %s24, 1
      %s405 = scalar_select %p404, %s24, 1
      %s406 = smul.addr %s405, 2
      %s407 = smul.addr %s406, 8
      %s408 = scalar_lea.vmem %s12, %s407
      %p409 = scmp.lt.s32.totalorder %s24, 1
      %s410 = scalar_select %p409, %s24, 1
      %s411 = smul.addr %s410, 4
      %s412 = scalar_lea.vmem %s0, %s411
      %p413 = scmp.lt.s32.totalorder %s24, 1
      %s414 = scalar_select %p413, %s24, 1
      %s415 = smul.addr %s414, 8
      %s416 = scalar_lea.vmem %s11, %s415
      %p417 = scmp.lt.s32.totalorder %s24, 1
      %s418 = scalar_select %p417, %s24, 1
      %s419 = smul.addr %s418, 2
      %s420 = smul.addr %s419, 8
      %s421 = scalar_lea.vmem %s12, %s420
      %v423 = vld [vmem:[%s412] sm:$0xf]
      %v424 = vld [vmem:[%s1] sm:$0xff]
      %v425 = vld [vmem:[%s1 + $0x8] sm:$0xf]
      %v426 = vld [vmem:[%s1 + $0xc] sm:$0xff]
      %v427 = vld [vmem:[%s1 + $0x14] sm:$0xf]
      %v428 = vld [vmem:[%s1 + $0x18] sm:$0xff]
      %v429 = vld [vmem:[%s1 + $0x20] sm:$0xf]
      %v430 = vld [vmem:[%s1 + $0x24] sm:$0x33]
      %v431 = vld [vmem:[%s1 + $0x2c] sm:$0x3]
      %v432 = vld [vmem:[%s2] sm:$0x7]
      %v434 = vlaneseq
      %v435 = vshrl.u32 %v434, 7
      %v436 = vsub.s32 0, %v435
      %v437 = vrot.slane %v432, %v436
      %v438 = vlaneseq
      %v439 = vshrl.u32 %v438, 7
      %v440 = vsub.s32 1, %v439
      %v441 = vrot.slane %v432, %v440
      %v442 = vlaneseq
      %v443 = vshrl.u32 %v442, 7
      %v444 = vsub.s32 2, %v443
      %v445 = vrot.slane %v432, %v444
      %v457 = vunpack.c.l.b16 %v424
      %v458 = vunpack.c.h.b16 %v424
      %v459 = vunpack.c.l.b16 %v425
      %v460 = vunpack.c.l.b16 %v426
      %v461 = vunpack.c.h.b16 %v426
      %v462 = vunpack.c.l.b16 %v427
      %v463 = vunpack.c.l.b16 %v428
      %v464 = vunpack.c.h.b16 %v428
      %v465 = vunpack.c.l.b16 %v429
      %v466 = vunpack.c.l.b16 %v430
      %v467 = vunpack.c.h.b16 %v430
      %v468 = vunpack.c.l.b16 %v431
      %v469 = vpack.c.b16 %v460, %v457
      %v470 = vpack.c.b16 %v461, %v458
      %v471 = vpack.c.b16 %v462, %v459
      %v472 = vpack.c.b16 %v466, %v463
      %v473 = vpack.c.b16 %v467, %v464
      %v474 = vpack.c.b16 %v468, %v465
      %vm478 = vcmask 228352
      %v480 = vsel %vm478, %v423, 0
      %vm482 = vcmask 1045504
      %v484 = vsel %vm482, %v472, 0
      %v487 = vsel %vm482, %v473, 0
      %v490 = vsel %vm482, %v474, 0
      %492 = vmatprep.subr.bf16.mxu0 0
      %493 = vmatpush1.bf16.msra.mxu0 0
      %494 = vmatprep.subr.bf16.mxu0 0
      %495 = vmatpush1.bf16.msra.mxu0 0
      %496 = vmatprep.subr.bf16.mxu0 0
      %497 = vmatpush1.bf16.msra.mxu0 0
      %498 = vmatprep.subr.bf16.mxu0 0
      %499 = vmatpush1.bf16.msra.mxu0 0
      %500 = vmatprep.subr.bf16.mxu0 0
      %501 = vmatpush1.bf16.msra.mxu0 0
      %502 = vmatprep.subr.bf16.mxu0 0
      %503 = vmatpush1.bf16.msra.mxu0 0
      %504 = vmatprep.subr.bf16.mxu0 %v487
      %505 = vmatpush1.bf16.msra.mxu0 %v484
      %506 = vmatprep.subr.bf16.mxu0 %v470
      %507 = vmatpush1.bf16.msra.mxu0 %v469
      %508 = vmatprep.subr.bf16.mxu0 0
      %509 = vmatpush2.bf16.msra.mxu0 0
      %510 = vmatprep.subr.bf16.mxu0 0
      %511 = vmatpush2.bf16.msra.mxu0 0
      %512 = vmatprep.subr.bf16.mxu0 0
      %513 = vmatpush2.bf16.msra.mxu0 0
      %514 = vmatprep.subr.bf16.mxu0 0
      %515 = vmatpush2.bf16.msra.mxu0 0
      %516 = vmatprep.subr.bf16.mxu0 0
      %517 = vmatpush2.bf16.msra.mxu0 0
      %518 = vmatprep.subr.bf16.mxu0 0
      %519 = vmatpush2.bf16.msra.mxu0 0
      %520 = vmatprep.subr.bf16.mxu0 0
      %521 = vmatpush2.bf16.msra.mxu0 0
      %522 = vmatprep.subr.bf16.mxu0 0
      %523 = vmatpush2.bf16.msra.mxu0 0
      %524 = vmatprep.mubr.bf16.mxu0 0
      %525 = vmatmul.mubr.bf16.gmra.mxu0 %v480
      %v526 = vpop.f32.mrf.mxu0
      %v527 = vadd.f32 %v437, %v526
      %v528 = vpop.f32.mrf.mxu0
      %v529 = vadd.f32 %v441, %v528
      %v530 = vpop.f32.mrf.mxu0
      %v531 = vpop.f32.mrf.mxu0
      %532 = vdwg.mxu0
      %533 = vmatprep.subr.bf16.mxu0 0
      %534 = vmatpush1.bf16.msra.mxu0 0
      %535 = vmatprep.subr.bf16.mxu0 0
      %536 = vmatpush1.bf16.msra.mxu0 0
      %537 = vmatprep.subr.bf16.mxu0 0
      %538 = vmatpush1.bf16.msra.mxu0 0
      %539 = vmatprep.subr.bf16.mxu0 0
      %540 = vmatpush1.bf16.msra.mxu0 0
      %541 = vmatprep.subr.bf16.mxu0 0
      %542 = vmatpush1.bf16.msra.mxu0 0
      %543 = vmatprep.subr.bf16.mxu0 0
      %544 = vmatpush1.bf16.msra.mxu0 0
      %545 = vmatprep.subr.bf16.mxu0 0
      %546 = vmatpush1.bf16.msra.mxu0 %v490
      %547 = vmatprep.subr.bf16.mxu0 0
      %548 = vmatpush1.bf16.msra.mxu0 %v471
      %549 = vmatprep.subr.bf16.mxu0 0
      %550 = vmatpush2.bf16.msra.mxu0 0
      %551 = vmatprep.subr.bf16.mxu0 0
      %552 = vmatpush2.bf16.msra.mxu0 0
      %553 = vmatprep.subr.bf16.mxu0 0
      %554 = vmatpush2.bf16.msra.mxu0 0
      %555 = vmatprep.subr.bf16.mxu0 0
      %556 = vmatpush2.bf16.msra.mxu0 0
      %557 = vmatprep.subr.bf16.mxu0 0
      %558 = vmatpush2.bf16.msra.mxu0 0
      %559 = vmatprep.subr.bf16.mxu0 0
      %560 = vmatpush2.bf16.msra.mxu0 0
      %561 = vmatprep.subr.bf16.mxu0 0
      %562 = vmatpush2.bf16.msra.mxu0 0
      %563 = vmatprep.subr.bf16.mxu0 0
      %564 = vmatpush2.bf16.msra.mxu0 0
      %565 = vmatprep.mubr.bf16.mxu0 0
      %566 = vmatmul.mubr.bf16.gmra.mxu0 %v480
      %v567 = vpop.f32.mrf.mxu0
      %v568 = vadd.f32 %v445, %v567
      %v569 = vpop.f32.mrf.mxu0
      %v570 = vpop.f32.mrf.mxu0
      %v571 = vpop.f32.mrf.mxu0
      %572 = vdwg.mxu0
      %v573 = vtanh.pop %v527
      %v574 = vtanh.pop %v529
      %v575 = vpack.c.bf16 %v573, %v573
      %v576 = vpack.c.bf16 %v574, %v574
      %v577 = vld [vmem:[%s3] sm:$0xff]
      %v578 = vld [vmem:[%s3 + $0x8] sm:$0xff]
      %v579 = vld [vmem:[%s3 + $0x10] sm:$0xff]
      %v580 = vld [vmem:[%s3 + $0x18] sm:$0xff]
      %v581 = vld [vmem:[%s3 + $0x20] sm:$0xff]
      %v582 = vld [vmem:[%s3 + $0x28] sm:$0xff]
      %v583 = vld [vmem:[%s3 + $0x30] sm:$0xff]
      %v584 = vld [vmem:[%s3 + $0x38] sm:$0xff]
      %v585 = vld [vmem:[%s3 + $0x40] sm:$0xff]
      %v586 = vld [vmem:[%s3 + $0x48] sm:$0xff]
      %v587 = vld [vmem:[%s3 + $0x50] sm:$0xff]
      %v588 = vld [vmem:[%s3 + $0x58] sm:$0xff]
      %v589 = vld [vmem:[%s3 + $0x60] sm:$0xff]
      %v590 = vld [vmem:[%s3 + $0x68] sm:$0xff]
      %v591 = vld [vmem:[%s3 + $0x70] sm:$0xff]
      %v592 = vld [vmem:[%s3 + $0x78] sm:$0xff]
      %v593 = vld [vmem:[%s3 + $0x80] sm:$0xff]
      %v594 = vld [vmem:[%s3 + $0x88] sm:$0xff]
      %v595 = vld [vmem:[%s3 + $0x90] sm:$0xff]
      %v596 = vld [vmem:[%s3 + $0x98] sm:$0xff]
      %v597 = vld [vmem:[%s3 + $0xa0] sm:$0xff]
      %v598 = vld [vmem:[%s3 + $0xa8] sm:$0xff]
      %v599 = vld [vmem:[%s3 + $0xb0] sm:$0xff]
      %v600 = vld [vmem:[%s3 + $0xb8] sm:$0xff]
      %v601 = vld [vmem:[%s3 + $0xc0] sm:$0xff]
      %v602 = vld [vmem:[%s3 + $0xc8] sm:$0xff]
      %v603 = vld [vmem:[%s3 + $0xd0] sm:$0xff]
      %v604 = vld [vmem:[%s3 + $0xd8] sm:$0xff]
      %v605 = vld [vmem:[%s3 + $0xe0] sm:$0xff]
      %v606 = vld [vmem:[%s3 + $0xe8] sm:$0xff]
      %v607 = vld [vmem:[%s3 + $0xf0] sm:$0xff]
      %v608 = vld [vmem:[%s3 + $0xf8] sm:$0xff]
      %v609 = vld [vmem:[%s4] sm:$0x3]
      %v611 = vlaneseq
      %v612 = vshrl.u32 %v611, 7
      %v613 = vsub.s32 0, %v612
      %v614 = vrot.slane %v609, %v613
      %v615 = vlaneseq
      %v616 = vshrl.u32 %v615, 7
      %v617 = vsub.s32 1, %v616
      %v618 = vrot.slane %v609, %v617
      %v653 = vunpack.c.l.b16 %v577
      %v654 = vunpack.c.h.b16 %v577
      %v655 = vunpack.c.l.b16 %v578
      %v656 = vunpack.c.h.b16 %v578
      %v657 = vunpack.c.l.b16 %v579
      %v658 = vunpack.c.h.b16 %v579
      %v659 = vunpack.c.l.b16 %v580
      %v660 = vunpack.c.h.b16 %v580
      %v661 = vunpack.c.l.b16 %v581
      %v662 = vunpack.c.h.b16 %v581
      %v663 = vunpack.c.l.b16 %v582
      %v664 = vunpack.c.h.b16 %v582
      %v665 = vunpack.c.l.b16 %v583
      %v666 = vunpack.c.h.b16 %v583
      %v667 = vunpack.c.l.b16 %v584
      %v668 = vunpack.c.h.b16 %v584
      %v669 = vunpack.c.l.b16 %v585
      %v670 = vunpack.c.h.b16 %v585
      %v671 = vunpack.c.l.b16 %v586
      %v672 = vunpack.c.h.b16 %v586
      %v673 = vunpack.c.l.b16 %v587
      %v674 = vunpack.c.h.b16 %v587
      %v675 = vunpack.c.l.b16 %v588
      %v676 = vunpack.c.h.b16 %v588
      %v677 = vunpack.c.l.b16 %v589
      %v678 = vunpack.c.h.b16 %v589
      %v679 = vunpack.c.l.b16 %v590
      %v680 = vunpack.c.h.b16 %v590
      %v681 = vunpack.c.l.b16 %v591
      %v682 = vunpack.c.h.b16 %v591
      %v683 = vunpack.c.l.b16 %v592
      %v684 = vunpack.c.h.b16 %v592
      %v685 = vunpack.c.l.b16 %v593
      %v686 = vunpack.c.h.b16 %v593
      %v687 = vunpack.c.l.b16 %v594
      %v688 = vunpack.c.h.b16 %v594
      %v689 = vunpack.c.l.b16 %v595
      %v690 = vunpack.c.h.b16 %v595
      %v691 = vunpack.c.l.b16 %v596
      %v692 = vunpack.c.h.b16 %v596
      %v693 = vunpack.c.l.b16 %v597
      %v694 = vunpack.c.h.b16 %v597
      %v695 = vunpack.c.l.b16 %v598
      %v696 = vunpack.c.h.b16 %v598
      %v697 = vunpack.c.l.b16 %v599
      %v698 = vunpack.c.h.b16 %v599
      %v699 = vunpack.c.l.b16 %v600
      %v700 = vunpack.c.h.b16 %v600
      %v701 = vunpack.c.l.b16 %v601
      %v702 = vunpack.c.h.b16 %v601
      %v703 = vunpack.c.l.b16 %v602
      %v704 = vunpack.c.h.b16 %v602
      %v705 = vunpack.c.l.b16 %v603
      %v706 = vunpack.c.h.b16 %v603
      %v707 = vunpack.c.l.b16 %v604
      %v708 = vunpack.c.h.b16 %v604
      %v709 = vunpack.c.l.b16 %v605
      %v710 = vunpack.c.h.b16 %v605
      %v711 = vunpack.c.l.b16 %v606
      %v712 = vunpack.c.h.b16 %v606
      %v713 = vunpack.c.l.b16 %v607
      %v714 = vunpack.c.h.b16 %v607
      %v715 = vunpack.c.l.b16 %v608
      %v716 = vunpack.c.h.b16 %v608
      %v717 = vpack.c.b16 %v655, %v653
      %v718 = vpack.c.b16 %v656, %v654
      %v719 = vpack.c.b16 %v659, %v657
      %v720 = vpack.c.b16 %v660, %v658
      %v721 = vpack.c.b16 %v663, %v661
      %v722 = vpack.c.b16 %v664, %v662
      %v723 = vpack.c.b16 %v667, %v665
      %v724 = vpack.c.b16 %v668, %v666
      %v725 = vpack.c.b16 %v671, %v669
      %v726 = vpack.c.b16 %v672, %v670
      %v727 = vpack.c.b16 %v675, %v673
      %v728 = vpack.c.b16 %v676, %v674
      %v729 = vpack.c.b16 %v679, %v677
      %v730 = vpack.c.b16 %v680, %v678
      %v731 = vpack.c.b16 %v683, %v681
      %v732 = vpack.c.b16 %v684, %v682
      %v733 = vpack.c.b16 %v687, %v685
      %v734 = vpack.c.b16 %v688, %v686
      %v735 = vpack.c.b16 %v691, %v689
      %v736 = vpack.c.b16 %v692, %v690
      %v737 = vpack.c.b16 %v695, %v693
      %v738 = vpack.c.b16 %v696, %v694
      %v739 = vpack.c.b16 %v699, %v697
      %v740 = vpack.c.b16 %v700, %v698
      %v741 = vpack.c.b16 %v703, %v701
      %v742 = vpack.c.b16 %v704, %v702
      %v743 = vpack.c.b16 %v707, %v705
      %v744 = vpack.c.b16 %v708, %v706
      %v745 = vpack.c.b16 %v711, %v709
      %v746 = vpack.c.b16 %v712, %v710
      %v747 = vpack.c.b16 %v715, %v713
      %v748 = vpack.c.b16 %v716, %v714
      %781 = vmatprep.subr.bf16.mxu0 %v732
      %782 = vmatpush1.bf16.msra.mxu0 %v731
      %783 = vmatprep.subr.bf16.mxu0 %v730
      %784 = vmatpush1.bf16.msra.mxu0 %v729
      %785 = vmatprep.subr.bf16.mxu0 %v728
      %786 = vmatpush1.bf16.msra.mxu0 %v727
      %787 = vmatprep.subr.bf16.mxu0 %v726
      %788 = vmatpush1.bf16.msra.mxu0 %v725
      %789 = vmatprep.subr.bf16.mxu0 %v724
      %790 = vmatpush1.bf16.msra.mxu0 %v723
      %791 = vmatprep.subr.bf16.mxu0 %v722
      %792 = vmatpush1.bf16.msra.mxu0 %v721
      %793 = vmatprep.subr.bf16.mxu0 %v720
      %794 = vmatpush1.bf16.msra.mxu0 %v719
      %795 = vmatprep.subr.bf16.mxu0 %v718
      %796 = vmatpush1.bf16.msra.mxu0 %v717
      %797 = vmatprep.subr.bf16.mxu0 %v748
      %798 = vmatpush2.bf16.msra.mxu0 %v747
      %799 = vmatprep.subr.bf16.mxu0 %v746
      %800 = vmatpush2.bf16.msra.mxu0 %v745
      %801 = vmatprep.subr.bf16.mxu0 %v744
      %802 = vmatpush2.bf16.msra.mxu0 %v743
      %803 = vmatprep.subr.bf16.mxu0 %v742
      %804 = vmatpush2.bf16.msra.mxu0 %v741
      %805 = vmatprep.subr.bf16.mxu0 %v740
      %806 = vmatpush2.bf16.msra.mxu0 %v739
      %807 = vmatprep.subr.bf16.mxu0 %v738
      %808 = vmatpush2.bf16.msra.mxu0 %v737
      %809 = vmatprep.subr.bf16.mxu0 %v736
      %810 = vmatpush2.bf16.msra.mxu0 %v735
      %811 = vmatprep.subr.bf16.mxu0 %v734
      %812 = vmatpush2.bf16.msra.mxu0 %v733
      %813 = vmatprep.mubr.bf16.mxu0 %v576
      %814 = vmatmul.mubr.bf16.gmra.mxu0 %v575
      %v815 = vpop.f32.mrf.mxu0
      %v816 = vadd.f32 %v614, %v815
      %v817 = vpop.f32.mrf.mxu0
      %v818 = vadd.f32 %v618, %v817
      %v819 = vpop.f32.mrf.mxu0
      %v820 = vpop.f32.mrf.mxu0
      %821 = vdwg.mxu0
      %v822 = vtanh.pop %v816
      %v823 = vtanh.pop %v818
      %v824 = vpack.c.bf16 %v822, %v822
      %v825 = vpack.c.bf16 %v823, %v823
      %v826 = vld [vmem:[%s5] sm:$0xf]
      %v827 = vld [vmem:[%s5 + $0x4] sm:$0xf]
      %v828 = vld [vmem:[%s5 + $0x8] sm:$0xf]
      %v829 = vld [vmem:[%s5 + $0xc] sm:$0xf]
      %v830 = vld [vmem:[%s5 + $0x10] sm:$0xf]
      %v831 = vld [vmem:[%s5 + $0x14] sm:$0xf]
      %v832 = vld [vmem:[%s5 + $0x18] sm:$0xf]
      %v833 = vld [vmem:[%s5 + $0x1c] sm:$0xf]
      %v834 = vld [vmem:[%s5 + $0x20] sm:$0xf]
      %v835 = vld [vmem:[%s5 + $0x24] sm:$0xf]
      %v836 = vld [vmem:[%s5 + $0x28] sm:$0xf]
      %v837 = vld [vmem:[%s5 + $0x2c] sm:$0xf]
      %v838 = vld [vmem:[%s5 + $0x30] sm:$0xf]
      %v839 = vld [vmem:[%s5 + $0x34] sm:$0xf]
      %v840 = vld [vmem:[%s5 + $0x38] sm:$0xf]
      %v841 = vld [vmem:[%s5 + $0x3c] sm:$0xf]
      %v842 = vld [vmem:[%s5 + $0x40] sm:$0xf]
      %v843 = vld [vmem:[%s5 + $0x44] sm:$0xf]
      %v844 = vld [vmem:[%s5 + $0x48] sm:$0xf]
      %v845 = vld [vmem:[%s5 + $0x4c] sm:$0xf]
      %v846 = vld [vmem:[%s5 + $0x50] sm:$0xf]
      %v847 = vld [vmem:[%s5 + $0x54] sm:$0xf]
      %v848 = vld [vmem:[%s5 + $0x58] sm:$0xf]
      %v849 = vld [vmem:[%s5 + $0x5c] sm:$0xf]
      %v850 = vld [vmem:[%s5 + $0x60] sm:$0xf]
      %v851 = vld [vmem:[%s5 + $0x64] sm:$0xf]
      %v852 = vld [vmem:[%s5 + $0x68] sm:$0xf]
      %v853 = vld [vmem:[%s5 + $0x6c] sm:$0xf]
      %v854 = vld [vmem:[%s5 + $0x70] sm:$0xf]
      %v855 = vld [vmem:[%s5 + $0x74] sm:$0xf]
      %v856 = vld [vmem:[%s5 + $0x78] sm:$0xf]
      %v857 = vld [vmem:[%s5 + $0x7c] sm:$0xf]
      %v858 = vld [vmem:[%s6] sm:$0x1]
      %v860 = vlaneseq
      %v861 = vshrl.u32 %v860, 7
      %v862 = vsub.s32 0, %v861
      %v863 = vrot.slane %v858, %v862
      %v897 = vunpack.c.l.b16 %v826
      %v898 = vunpack.c.l.b16 %v827
      %v899 = vunpack.c.l.b16 %v828
      %v900 = vunpack.c.l.b16 %v829
      %v901 = vunpack.c.l.b16 %v830
      %v902 = vunpack.c.l.b16 %v831
      %v903 = vunpack.c.l.b16 %v832
      %v904 = vunpack.c.l.b16 %v833
      %v905 = vunpack.c.l.b16 %v834
      %v906 = vunpack.c.l.b16 %v835
      %v907 = vunpack.c.l.b16 %v836
      %v908 = vunpack.c.l.b16 %v837
      %v909 = vunpack.c.l.b16 %v838
      %v910 = vunpack.c.l.b16 %v839
      %v911 = vunpack.c.l.b16 %v840
      %v912 = vunpack.c.l.b16 %v841
      %v913 = vunpack.c.l.b16 %v842
      %v914 = vunpack.c.l.b16 %v843
      %v915 = vunpack.c.l.b16 %v844
      %v916 = vunpack.c.l.b16 %v845
      %v917 = vunpack.c.l.b16 %v846
      %v918 = vunpack.c.l.b16 %v847
      %v919 = vunpack.c.l.b16 %v848
      %v920 = vunpack.c.l.b16 %v849
      %v921 = vunpack.c.l.b16 %v850
      %v922 = vunpack.c.l.b16 %v851
      %v923 = vunpack.c.l.b16 %v852
      %v924 = vunpack.c.l.b16 %v853
      %v925 = vunpack.c.l.b16 %v854
      %v926 = vunpack.c.l.b16 %v855
      %v927 = vunpack.c.l.b16 %v856
      %v928 = vunpack.c.l.b16 %v857
      %v929 = vpack.c.b16 %v898, %v897
      %v930 = vpack.c.b16 %v900, %v899
      %v931 = vpack.c.b16 %v902, %v901
      %v932 = vpack.c.b16 %v904, %v903
      %v933 = vpack.c.b16 %v906, %v905
      %v934 = vpack.c.b16 %v908, %v907
      %v935 = vpack.c.b16 %v910, %v909
      %v936 = vpack.c.b16 %v912, %v911
      %v937 = vpack.c.b16 %v914, %v913
      %v938 = vpack.c.b16 %v916, %v915
      %v939 = vpack.c.b16 %v918, %v917
      %v940 = vpack.c.b16 %v920, %v919
      %v941 = vpack.c.b16 %v922, %v921
      %v942 = vpack.c.b16 %v924, %v923
      %v943 = vpack.c.b16 %v926, %v925
      %v944 = vpack.c.b16 %v928, %v927
      %961 = vmatprep.subr.bf16.mxu0 0
      %962 = vmatpush1.bf16.msra.mxu0 %v936
      %963 = vmatprep.subr.bf16.mxu0 0
      %964 = vmatpush1.bf16.msra.mxu0 %v935
      %965 = vmatprep.subr.bf16.mxu0 0
      %966 = vmatpush1.bf16.msra.mxu0 %v934
      %967 = vmatprep.subr.bf16.mxu0 0
      %968 = vmatpush1.bf16.msra.mxu0 %v933
      %969 = vmatprep.subr.bf16.mxu0 0
      %970 = vmatpush1.bf16.msra.mxu0 %v932
      %971 = vmatprep.subr.bf16.mxu0 0
      %972 = vmatpush1.bf16.msra.mxu0 %v931
      %973 = vmatprep.subr.bf16.mxu0 0
      %974 = vmatpush1.bf16.msra.mxu0 %v930
      %975 = vmatprep.subr.bf16.mxu0 0
      %976 = vmatpush1.bf16.msra.mxu0 %v929
      %977 = vmatprep.subr.bf16.mxu0 0
      %978 = vmatpush2.bf16.msra.mxu0 %v944
      %979 = vmatprep.subr.bf16.mxu0 0
      %980 = vmatpush2.bf16.msra.mxu0 %v943
      %981 = vmatprep.subr.bf16.mxu0 0
      %982 = vmatpush2.bf16.msra.mxu0 %v942
      %983 = vmatprep.subr.bf16.mxu0 0
      %984 = vmatpush2.bf16.msra.mxu0 %v941
      %985 = vmatprep.subr.bf16.mxu0 0
      %986 = vmatpush2.bf16.msra.mxu0 %v940
      %987 = vmatprep.subr.bf16.mxu0 0
      %988 = vmatpush2.bf16.msra.mxu0 %v939
      %989 = vmatprep.subr.bf16.mxu0 0
      %990 = vmatpush2.bf16.msra.mxu0 %v938
      %991 = vmatprep.subr.bf16.mxu0 0
      %992 = vmatpush2.bf16.msra.mxu0 %v937
      %993 = vmatprep.mubr.bf16.mxu0 %v825
      %994 = vmatmul.mubr.bf16.gmra.mxu0 %v824
      %v995 = vpop.f32.mrf.mxu0
      %v996 = vadd.f32 %v863, %v995
      %v997 = vpop.f32.mrf.mxu0
      %v998 = vpop.f32.mrf.mxu0
      %v999 = vpop.f32.mrf.mxu0
      %1000 = vdwg.mxu0
      %v1001 = vtanh.pop %v996
      %v1002 = vpack.c.bf16 %v1001, %v1001
      %v1003 = vld [vmem:[%s7] sm:$0xf]
      %v1004 = vld [vmem:[%s7 + $0x4] sm:$0xf]
      %v1005 = vld [vmem:[%s7 + $0x8] sm:$0xf]
      %v1006 = vld [vmem:[%s7 + $0xc] sm:$0xf]
      %v1007 = vld [vmem:[%s7 + $0x10] sm:$0xf]
      %v1008 = vld [vmem:[%s7 + $0x14] sm:$0xf]
      %v1009 = vld [vmem:[%s7 + $0x18] sm:$0xf]
      %v1010 = vld [vmem:[%s7 + $0x1c] sm:$0xf]
      %v1011 = vld [vmem:[%s7 + $0x20] sm:$0xf]
      %v1012 = vld [vmem:[%s7 + $0x24] sm:$0xf]
      %v1013 = vld [vmem:[%s7 + $0x28] sm:$0xf]
      %v1014 = vld [vmem:[%s7 + $0x2c] sm:$0xf]
      %v1015 = vld [vmem:[%s7 + $0x30] sm:$0xf]
      %v1016 = vld [vmem:[%s7 + $0x34] sm:$0xf]
      %v1017 = vld [vmem:[%s7 + $0x38] sm:$0xf]
      %v1018 = vld [vmem:[%s7 + $0x3c] sm:$0xf]
      %v1019 = vld [vmem:[%s8] sm:$0x1]
      %v1021 = vlaneseq
      %v1022 = vshrl.u32 %v1021, 7
      %v1023 = vsub.s32 0, %v1022
      %v1024 = vrot.slane %v1019, %v1023
      %v1042 = vunpack.c.l.b16 %v1003
      %v1043 = vunpack.c.l.b16 %v1004
      %v1044 = vunpack.c.l.b16 %v1005
      %v1045 = vunpack.c.l.b16 %v1006
      %v1046 = vunpack.c.l.b16 %v1007
      %v1047 = vunpack.c.l.b16 %v1008
      %v1048 = vunpack.c.l.b16 %v1009
      %v1049 = vunpack.c.l.b16 %v1010
      %v1050 = vunpack.c.l.b16 %v1011
      %v1051 = vunpack.c.l.b16 %v1012
      %v1052 = vunpack.c.l.b16 %v1013
      %v1053 = vunpack.c.l.b16 %v1014
      %v1054 = vunpack.c.l.b16 %v1015
      %v1055 = vunpack.c.l.b16 %v1016
      %v1056 = vunpack.c.l.b16 %v1017
      %v1057 = vunpack.c.l.b16 %v1018
      %v1058 = vpack.c.b16 %v1043, %v1042
      %v1059 = vpack.c.b16 %v1045, %v1044
      %v1060 = vpack.c.b16 %v1047, %v1046
      %v1061 = vpack.c.b16 %v1049, %v1048
      %v1062 = vpack.c.b16 %v1051, %v1050
      %v1063 = vpack.c.b16 %v1053, %v1052
      %v1064 = vpack.c.b16 %v1055, %v1054
      %v1065 = vpack.c.b16 %v1057, %v1056
      %1074 = vmatprep.subr.bf16.mxu0 0
      %1075 = vmatpush1.bf16.msra.mxu0 %v1065
      %1076 = vmatprep.subr.bf16.mxu0 0
      %1077 = vmatpush1.bf16.msra.mxu0 %v1064
      %1078 = vmatprep.subr.bf16.mxu0 0
      %1079 = vmatpush1.bf16.msra.mxu0 %v1063
      %1080 = vmatprep.subr.bf16.mxu0 0
      %1081 = vmatpush1.bf16.msra.mxu0 %v1062
      %1082 = vmatprep.subr.bf16.mxu0 0
      %1083 = vmatpush1.bf16.msra.mxu0 %v1061
      %1084 = vmatprep.subr.bf16.mxu0 0
      %1085 = vmatpush1.bf16.msra.mxu0 %v1060
      %1086 = vmatprep.subr.bf16.mxu0 0
      %1087 = vmatpush1.bf16.msra.mxu0 %v1059
      %1088 = vmatprep.subr.bf16.mxu0 0
      %1089 = vmatpush1.bf16.msra.mxu0 %v1058
      %1090 = vmatprep.subr.bf16.mxu0 0
      %1091 = vmatpush2.bf16.msra.mxu0 0
      %1092 = vmatprep.subr.bf16.mxu0 0
      %1093 = vmatpush2.bf16.msra.mxu0 0
      %1094 = vmatprep.subr.bf16.mxu0 0
      %1095 = vmatpush2.bf16.msra.mxu0 0
      %1096 = vmatprep.subr.bf16.mxu0 0
      %1097 = vmatpush2.bf16.msra.mxu0 0
      %1098 = vmatprep.subr.bf16.mxu0 0
      %1099 = vmatpush2.bf16.msra.mxu0 0
      %1100 = vmatprep.subr.bf16.mxu0 0
      %1101 = vmatpush2.bf16.msra.mxu0 0
      %1102 = vmatprep.subr.bf16.mxu0 0
      %1103 = vmatpush2.bf16.msra.mxu0 0
      %1104 = vmatprep.subr.bf16.mxu0 0
      %1105 = vmatpush2.bf16.msra.mxu0 0
      %1106 = vmatprep.mubr.bf16.mxu0 0
      %1107 = vmatmul.mubr.bf16.gmra.mxu0 %v1002
      %v1108 = vpop.f32.mrf.mxu0
      %v1109 = vadd.f32 %v1024, %v1108
      %v1110 = vpop.f32.mrf.mxu0
      %v1111 = vpop.f32.mrf.mxu0
      %v1112 = vpop.f32.mrf.mxu0
      %1113 = vdwg.mxu0
      %v1114 = vtanh.pop %v1109
      %v1115 = vpack.c.bf16 %v1114, %v1114
      %v1116 = vld [vmem:[%s9] sm:$0xf]
      %v1117 = vld [vmem:[%s9 + $0x4] sm:$0xf]
      %v1118 = vld [vmem:[%s9 + $0x8] sm:$0xf]
      %v1119 = vld [vmem:[%s9 + $0xc] sm:$0xf]
      %v1120 = vld [vmem:[%s9 + $0x10] sm:$0xf]
      %v1121 = vld [vmem:[%s9 + $0x14] sm:$0xf]
      %v1122 = vld [vmem:[%s9 + $0x18] sm:$0xf]
      %v1123 = vld [vmem:[%s9 + $0x1c] sm:$0xf]
      %v1124 = vld [vmem:[%s9 + $0x20] sm:$0xf]
      %v1125 = vld [vmem:[%s9 + $0x24] sm:$0xf]
      %v1126 = vld [vmem:[%s9 + $0x28] sm:$0xf]
      %v1127 = vld [vmem:[%s9 + $0x2c] sm:$0xf]
      %v1128 = vld [vmem:[%s9 + $0x30] sm:$0xf]
      %v1129 = vld [vmem:[%s9 + $0x34] sm:$0xf]
      %v1130 = vld [vmem:[%s9 + $0x38] sm:$0xf]
      %v1131 = vld [vmem:[%s9 + $0x3c] sm:$0xf]
      %v1132 = vld [vmem:[%s10] sm:$0x1]
      %v1134 = vlaneseq
      %v1135 = vshrl.u32 %v1134, 7
      %v1136 = vsub.s32 0, %v1135
      %v1137 = vrot.slane %v1132, %v1136
      %v1155 = vunpack.c.l.b16 %v1116
      %v1156 = vunpack.c.l.b16 %v1117
      %v1157 = vunpack.c.l.b16 %v1118
      %v1158 = vunpack.c.l.b16 %v1119
      %v1159 = vunpack.c.l.b16 %v1120
      %v1160 = vunpack.c.l.b16 %v1121
      %v1161 = vunpack.c.l.b16 %v1122
      %v1162 = vunpack.c.l.b16 %v1123
      %v1163 = vunpack.c.l.b16 %v1124
      %v1164 = vunpack.c.l.b16 %v1125
      %v1165 = vunpack.c.l.b16 %v1126
      %v1166 = vunpack.c.l.b16 %v1127
      %v1167 = vunpack.c.l.b16 %v1128
      %v1168 = vunpack.c.l.b16 %v1129
      %v1169 = vunpack.c.l.b16 %v1130
      %v1170 = vunpack.c.l.b16 %v1131
      %v1171 = vpack.c.b16 %v1156, %v1155
      %v1172 = vpack.c.b16 %v1158, %v1157
      %v1173 = vpack.c.b16 %v1160, %v1159
      %v1174 = vpack.c.b16 %v1162, %v1161
      %v1175 = vpack.c.b16 %v1164, %v1163
      %v1176 = vpack.c.b16 %v1166, %v1165
      %v1177 = vpack.c.b16 %v1168, %v1167
      %v1178 = vpack.c.b16 %v1170, %v1169
      %1187 = vmatprep.subr.bf16.mxu0 0
      %1188 = vmatpush1.bf16.msra.mxu0 %v1178
      %1189 = vmatprep.subr.bf16.mxu0 0
      %1190 = vmatpush1.bf16.msra.mxu0 %v1177
      %1191 = vmatprep.subr.bf16.mxu0 0
      %1192 = vmatpush1.bf16.msra.mxu0 %v1176
      %1193 = vmatprep.subr.bf16.mxu0 0
      %1194 = vmatpush1.bf16.msra.mxu0 %v1175
      %1195 = vmatprep.subr.bf16.mxu0 0
      %1196 = vmatpush1.bf16.msra.mxu0 %v1174
      %1197 = vmatprep.subr.bf16.mxu0 0
      %1198 = vmatpush1.bf16.msra.mxu0 %v1173
      %1199 = vmatprep.subr.bf16.mxu0 0
      %1200 = vmatpush1.bf16.msra.mxu0 %v1172
      %1201 = vmatprep.subr.bf16.mxu0 0
      %1202 = vmatpush1.bf16.msra.mxu0 %v1171
      %1203 = vmatprep.subr.bf16.mxu0 0
      %1204 = vmatpush2.bf16.msra.mxu0 0
      %1205 = vmatprep.subr.bf16.mxu0 0
      %1206 = vmatpush2.bf16.msra.mxu0 0
      %1207 = vmatprep.subr.bf16.mxu0 0
      %1208 = vmatpush2.bf16.msra.mxu0 0
      %1209 = vmatprep.subr.bf16.mxu0 0
      %1210 = vmatpush2.bf16.msra.mxu0 0
      %1211 = vmatprep.subr.bf16.mxu0 0
      %1212 = vmatpush2.bf16.msra.mxu0 0
      %1213 = vmatprep.subr.bf16.mxu0 0
      %1214 = vmatpush2.bf16.msra.mxu0 0
      %1215 = vmatprep.subr.bf16.mxu0 0
      %1216 = vmatpush2.bf16.msra.mxu0 0
      %1217 = vmatprep.subr.bf16.mxu0 0
      %1218 = vmatpush2.bf16.msra.mxu0 0
      %1219 = vmatprep.mubr.bf16.mxu0 0
      %1220 = vmatmul.mubr.bf16.gmra.mxu0 %v1115
      %v1221 = vpop.f32.mrf.mxu0
      %v1222 = vadd.f32 %v1137, %v1221
      %v1223 = vpop.f32.mrf.mxu0
      %v1224 = vpop.f32.mrf.mxu0
      %v1225 = vpop.f32.mrf.mxu0
      %1226 = vdwg.mxu0
      %1227 = vmax.xlane.f32.xlu0 %v1222
      %v1228 = vpop.xlane.xlu0 %1227
      %v1229 = vsub.f32 %v1222, %v1228
      %v1230 = vmul.f32 %v1229, 1.442695
      %v1231 = vpow.pop %v1230
      %1232 = vadd.xlane.f32.xlu0 %v1231
      %v1233 = vpop.xlane.xlu0 %1232
      %v1234 = vmul.f32 %v1233, 0.5
      %v1235 = vrcp.pop %v1234
      %v1236 = vmul.f32 %v1231, %v1235
      %v1237 = vlaneseq
      %v1238 = vand.u32 %v1237, 127
      %vm1239 = vcmp.lt.s32.totalorder %v1238, 16
      %v1240 = vsel %vm1239, %v1222, %v1236
      %vm1241 = vcmp.lt.s32.totalorder %v1238, 32
      %v1242 = vsel %vm1241, %v1240, %v568
      %1243 = vst [vmem:[%s416] sm:$0xff] %v1242
      %v1244 = vlaneseq
      %v1245 = vshrl.u32 %v1244, 7
      %vm1246 = vcmp.lt.s32.totalorder %v1245, 0
      %v1247 = vsub.s32 0, %v1245
      %v1248 = vsel %vm1246, %v1247, %v1245
      %v1249 = vshrl.u32 %v1248, 3
      %v1250 = vand.u32 %v1248, 7
      %v1251 = vsub.s32 0, %v1250
      %v1252 = vsel %vm1246, %v1251, %v1250
      %vm1253 = vcmp.ne.s32.totalorder %v1252, 0
      %vm1254 = vcmp.lt.s32.totalorder %v1252, 0
      %vm1255 = vmand %vm1254, %vm1253
      %v1256 = vadd.s32 %v1252, 8
      %v1257 = vsel %vm1255, %v1256, %v1252
      %vm1258 = vcmp.ne.s32.totalorder %v1257, 7
      %v1259 = vsel %vm1258, 1, 0
      %v1260 = vcvt.s32.f32 %v1259
      %v1261 = vmul.f32 %v1236, %v1260
      %1262 = vxpose.xlu0.b32.start [1/16] %v1261, 128
      %1263 = vxpose.xlu0.b32.cont [2/16] 0.0, 128
      %1264 = vxpose.xlu0.b32.cont [3/16] 0.0, 128
      %1265 = vxpose.xlu0.b32.cont [4/16] 0.0, 128
      %1266 = vxpose.xlu0.b32.cont [5/16] 0.0, 128
      %1267 = vxpose.xlu0.b32.cont [6/16] 0.0, 128
      %1268 = vxpose.xlu0.b32.cont [7/16] 0.0, 128
      %1269 = vxpose.xlu0.b32.cont [8/16] 0.0, 128
      %1270 = vxpose.xlu0.b32.cont [9/16] 0.0, 128
      %1271 = vxpose.xlu0.b32.cont [10/16] 0.0, 128
      %1272 = vxpose.xlu0.b32.cont [11/16] 0.0, 128
      %1273 = vxpose.xlu0.b32.cont [12/16] 0.0, 128
      %1274 = vxpose.xlu0.b32.cont [13/16] 0.0, 128
      %1275 = vxpose.xlu0.b32.cont [14/16] 0.0, 128
      %1276 = vxpose.xlu0.b32.cont [15/16] 0.0, 128
      %1277 = vxpose.xlu0.b32.end [16/16] 0.0, 128
      %v1278 = vpop.trf.xlu0
      %v1279 = vpop.trf.xlu0
      %v1280 = vpop.trf.xlu0
      %v1281 = vpop.trf.xlu0
      %v1282 = vpop.trf.xlu0
      %v1283 = vpop.trf.xlu0
      %v1284 = vpop.trf.xlu0
      %v1285 = vpop.trf.xlu0
      %v1286 = vpop.trf.xlu0
      %v1287 = vpop.trf.xlu0
      %v1288 = vpop.trf.xlu0
      %v1289 = vpop.trf.xlu0
      %v1290 = vpop.trf.xlu0
      %v1291 = vpop.trf.xlu0
      %v1292 = vpop.trf.xlu0
      %v1293 = vpop.trf.xlu0
      %v1295 = vrot.slane %v1236, 1
      %vm1296 = vcmask 56320
      %v1298 = vsel %vm1296, %v1278, 0
      %v1301 = vsel %vm1296, %v1279, 0
      %vm1303 = vcmask 1046528
      %v1304 = vsel %vm1303, %v1295, 0
      %1306 = vmatprep.subr.mxu0 0.0
      %1307 = vmatpush1.msra.mxu0 0.0
      %1308 = vmatprep.subr.mxu0 0.0
      %1309 = vmatpush1.msra.mxu0 0.0
      %1310 = vmatprep.subr.mxu0 0.0
      %1311 = vmatpush1.msra.mxu0 0.0
      %1312 = vmatprep.subr.mxu0 0.0
      %1313 = vmatpush1.msra.mxu0 0.0
      %1314 = vmatprep.subr.mxu0 0.0
      %1315 = vmatpush1.msra.mxu0 0.0
      %1316 = vmatprep.subr.mxu0 0.0
      %1317 = vmatpush1.msra.mxu0 0.0
      %1318 = vmatprep.subr.mxu0 0.0
      %1319 = vmatpush1.msra.mxu0 0.0
      %1320 = vmatprep.subr.mxu0 0.0
      %1321 = vmatpush1.msra.mxu0 0.0
      %1322 = vmatprep.subr.mxu0 0.0
      %1323 = vmatpush1.msra.mxu0 0.0
      %1324 = vmatprep.subr.mxu0 0.0
      %1325 = vmatpush1.msra.mxu0 0.0
      %1326 = vmatprep.subr.mxu0 0.0
      %1327 = vmatpush1.msra.mxu0 0.0
      %1328 = vmatprep.subr.mxu0 0.0
      %1329 = vmatpush1.msra.mxu0 0.0
      %1330 = vmatprep.subr.mxu0 0.0
      %1331 = vmatpush1.msra.mxu0 0.0
      %1332 = vmatprep.subr.mxu0 0.0
      %1333 = vmatpush1.msra.mxu0 0.0
      %1334 = vmatprep.subr.mxu0 0.0
      %1335 = vmatpush1.msra.mxu0 0.0
      %1336 = vmatprep.subr.mxu0 0.0
      %1337 = vmatpush1.msra.mxu0 %v1304
      %1338 = vmatprep.subr.mxu0 0.0
      %1339 = vmatpush2.msra.mxu0 0.0
      %1340 = vmatprep.subr.mxu0 0.0
      %1341 = vmatpush2.msra.mxu0 0.0
      %1342 = vmatprep.subr.mxu0 0.0
      %1343 = vmatpush2.msra.mxu0 0.0
      %1344 = vmatprep.subr.mxu0 0.0
      %1345 = vmatpush2.msra.mxu0 0.0
      %1346 = vmatprep.subr.mxu0 0.0
      %1347 = vmatpush2.msra.mxu0 0.0
      %1348 = vmatprep.subr.mxu0 0.0
      %1349 = vmatpush2.msra.mxu0 0.0
      %1350 = vmatprep.subr.mxu0 0.0
      %1351 = vmatpush2.msra.mxu0 0.0
      %1352 = vmatprep.subr.mxu0 0.0
      %1353 = vmatpush2.msra.mxu0 0.0
      %1354 = vmatprep.subr.mxu0 0.0
      %1355 = vmatpush2.msra.mxu0 0.0
      %1356 = vmatprep.subr.mxu0 0.0
      %1357 = vmatpush2.msra.mxu0 0.0
      %1358 = vmatprep.subr.mxu0 0.0
      %1359 = vmatpush2.msra.mxu0 0.0
      %1360 = vmatprep.subr.mxu0 0.0
      %1361 = vmatpush2.msra.mxu0 0.0
      %1362 = vmatprep.subr.mxu0 0.0
      %1363 = vmatpush2.msra.mxu0 0.0
      %1364 = vmatprep.subr.mxu0 0.0
      %1365 = vmatpush2.msra.mxu0 0.0
      %1366 = vmatprep.subr.mxu0 0.0
      %1367 = vmatpush2.msra.mxu0 0.0
      %1368 = vmatprep.subr.mxu0 0.0
      %1369 = vmatpush2.msra.mxu0 0.0
      %1370 = vmatprep.mubr.f32.mxu0 0.0
      %1371 = vmatmul.mubr.f32.gmra.mxu0 %v1298
      %v1372 = vpop.f32.mrf.mxu0
      %v1373 = vadd.f32 0.0, %v1372
      %v1374 = vpop.f32.mrf.mxu0
      %1375 = vmatprep.mubr.f32.mxu0 0.0
      %1376 = vmatmul.mubr.f32.gmra.mxu0 %v1301
      %v1377 = vpop.f32.mrf.mxu0
      %v1378 = vadd.f32 0.0, %v1377
      %v1379 = vpop.f32.mrf.mxu0
      %1380 = vdwg.mxu0
      %vm1381 = vcmask 130048
      %1382 = vst.msk [vmem:[%s421] sm:$0xff] %vm1381, %v1373
      %1383 = vst.msk [vmem:[%s421 + $0x8] sm:$0xff] %vm1381, %v1378
      %p1384 = scmp.lt.s32.totalorder %s24, 1
      %s1385 = scalar_select %p1384, %s24, 1
      %s1386 = smul.addr %s1385, 8
      %s1387 = scalar_lea.vmem %s11, %s1386
      %p1388 = scmp.lt.s32.totalorder %s24, 1
      %s1389 = scalar_select %p1388, %s24, 1
      %s1390 = smul.addr %s1389, 2
      %s1391 = smul.addr %s1390, 8
      %s1392 = scalar_lea.vmem %s12, %s1391
      // Predicated region
      $region65: #{bcsdn_forward.1} parent=63 // pred_check
        %p1393 = pneg %p278
      $region66: #{bcsdn_forward.1} parent=63 // pred_check_branch
        %1395 = sbr.rel (%p1393) target = $region68
      $region67: #{bcsdn_forward.1} parent=63 // pred_region
        _
      $region68: #{bcsdn_forward.1} parent=63 // pred_fallthru
        _
      // Predicated region
      $region69: #{bcsdn_forward.1} parent=63 // pred_check
        %p1396 = pneg %p304
      $region70: #{bcsdn_forward.1} parent=63 // pred_check_branch
        %1398 = sbr.rel (%p1396) target = $region72
      $region71: #{bcsdn_forward.1} parent=63 // pred_region
        _
      $region72: #{bcsdn_forward.1} parent=63 // pred_fallthru
        _
    $region64: #{bcsdn_forward.1} parent=5 // pred_fallthru
      _
    %p1399 = scmp.le.s32.totalorder 2, %s19
    // Predicated region
    $region73: #{bcsdn_forward.1} parent=5 // pred_check
      %p1400 = pneg %p1399
    $region74: #{bcsdn_forward.1} parent=5 // pred_check_branch
      %1402 = sbr.rel (%p1400) target = $region76
    $region75: #{bcsdn_forward.1} parent=5 // pred_region
      %s1403 = ssub.s32 %s19, 2
      // Predicated region
      $region77: #{bcsdn_forward.1} parent=75 // pred_check
        %p1404 = pneg %p284
      $region78: #{bcsdn_forward.1} parent=75 // pred_check_branch
        %1406 = sbr.rel (%p1404) target = $region80
      $region79: #{bcsdn_forward.1} parent=75 // pred_region
        %p1407 = scmp.lt.s32.totalorder %s25, 1
        %s1408 = scalar_select %p1407, %s25, 1
        %s1409 = smul.addr %s1408, 8
        %s1410 = scalar_lea.vmem %s11, %s1409
      $region80: #{bcsdn_forward.1} parent=75 // pred_fallthru
        _
      // Predicated region
      $region81: #{bcsdn_forward.1} parent=75 // pred_check
        %p1411 = pneg %p310
      $region82: #{bcsdn_forward.1} parent=75 // pred_check_branch
        %1413 = sbr.rel (%p1411) target = $region84
      $region83: #{bcsdn_forward.1} parent=75 // pred_region
        %p1414 = scmp.lt.s32.totalorder %s25, 1
        %s1415 = scalar_select %p1414, %s25, 1
        %s1416 = smul.addr %s1415, 2
        %s1417 = smul.addr %s1416, 8
        %s1418 = scalar_lea.vmem %s12, %s1417
      $region84: #{bcsdn_forward.1} parent=75 // pred_fallthru
        _
    $region76: #{bcsdn_forward.1} parent=5 // pred_fallthru
      _
  $region6: #{bcsdn_forward.1} parent=0 // loop_footer
    %s23 = sadd.s32 1, %s19
  $region7: #{bcsdn_forward.1} parent=0 // loop_footer_branch
    %18 = sbr.rel target = $region3
  $region8: #{bcsdn_forward.1} parent=0 // loop_exit
    _

</llo_original>
